<compile_context>
chip_gen: v6e
topology: v6e:2x2x1
jax: 0.10.0
libtpu: 0.0.40
codegen_flags: <defaults>
</compile_context>

<pallas_src>
import jax
import jax.numpy as jnp
from jax.experimental import pallas as pl
from jax.experimental.pallas import tpu as pltpu

LANE = 128  # decoder output dim is padded to this for lane-dense stores


# ----------------------------- in-kernel helpers ----------------------------

def _tcn_stack(h, w_ref, b_ref, dilations, L):
    """Stack of TemporalBlocks on a flattened (n_seg*L, C) activation slab.

    Each block: two causal dilated Conv1d(kernel_size=2) + ReLU, then identity
    residual + ReLU (n_in == n_out).  The causal shift is a slice + zero-pad +
    per-segment mask (no MXU work); the two conv taps are fused into one
    K = 2C bf16 matmul per conv.
    """
    M, C = h.shape
    # local time index within each length-L segment (causal zero-pad mask)
    local_t = jax.lax.broadcasted_iota(jnp.int32, (M, C), 0) % L
    for lvl, d in enumerate(dilations):
        res = h
        for conv in (0, 1):
            if d < L:
                # global shift down by d rows, then zero the first d rows of
                # every segment (also kills any cross-segment leakage).
                hs = jnp.concatenate(
                    [jnp.zeros((d, C), jnp.float32), h[:M - d, :]], axis=0)
                hs = jnp.where(local_t >= d, hs, 0.0)
            else:
                hs = jnp.zeros((M, C), jnp.float32)
            # fused 2-tap conv: [h[t-d], h[t]] @ [w_tap0; w_tap1]  (K = 2C, bf16)
            hcat = jnp.concatenate([hs, h], axis=-1).astype(jnp.bfloat16)
            h = jnp.maximum(
                jnp.dot(hcat, w_ref[lvl, conv],
                        preferred_element_type=jnp.float32)
                + b_ref[lvl, conv],
                0.0)
        h = jnp.maximum(h + res, 0.0)   # identity residual + ReLU
    return h


def make_fused_kernel(L, C, dil_outer, dil_center):
    def kernel(x_out_ref, x_ctr_ref,
               w_out_ref, b_out_ref, w_ctr_ref, b_ctr_ref,
               wd_ref, bd_ref, o_ref):
        # --- TCNs: before & behind share tcn_outer -> already stacked as (2L, C)
        h_out = _tcn_stack(x_out_ref[0], w_out_ref, b_out_ref, dil_outer, L)
        h_ctr = _tcn_stack(x_ctr_ref[0], w_ctr_ref, b_ctr_ref, dil_center, L)

        # --- mean over the sequence dim of each segment ----------------------
        m_b = jnp.mean(h_out[:L], axis=0, keepdims=True)    # (1, C) before
        m_h = jnp.mean(h_out[L:], axis=0, keepdims=True)    # (1, C) behind
        m_c = jnp.mean(h_ctr, axis=0, keepdims=True)        # (1, C) center

        # --- folded heads + decoder: one (1, 3C) @ (3C, LANE) matmul ----------
        feat = jnp.concatenate([m_b, m_c, m_h], axis=-1)     # (1, 3C)
        o_ref[0] = (jnp.dot(feat, wd_ref[...],
                            preferred_element_type=jnp.float32)
                    + bd_ref[...])                           # (1, LANE)
    return kernel


# ----------------------------- pallas_call wrapper ---------------------------

def cps_tcn_fused(x_outer, x_center, packed):
    """x_outer: (B, 2L, C) [before; behind], x_center: (B, L, C) -> (B, LANE)."""
    B, L, C = x_center.shape
    n_out = packed["w_tcn_outer"].shape[0]
    n_ctr = packed["w_tcn_center"].shape[0]
    kernel = make_fused_kernel(L, C, packed["dil_outer"], packed["dil_center"])
    out = pl.pallas_call(
        kernel,
        out_shape=jax.ShapeDtypeStruct((B, 1, LANE), jnp.float32),
        grid=(B,),
        in_specs=[
            pl.BlockSpec((1, 2 * L, C), lambda b: (b, 0, 0)),            # x outer (before;behind)
            pl.BlockSpec((1, L, C), lambda b: (b, 0, 0)),                # x center
            pl.BlockSpec((n_out, 2, 2 * C, C), lambda b: (0, 0, 0, 0)),  # outer conv W (bf16)
            pl.BlockSpec((n_out, 2, 1, C), lambda b: (0, 0, 0, 0)),      # outer conv b
            pl.BlockSpec((n_ctr, 2, 2 * C, C), lambda b: (0, 0, 0, 0)),  # center conv W (bf16)
            pl.BlockSpec((n_ctr, 2, 1, C), lambda b: (0, 0, 0, 0)),      # center conv b
            pl.BlockSpec((3 * C, LANE), lambda b: (0, 0)),               # folded heads+decoder W
            pl.BlockSpec((1, LANE), lambda b: (0, 0)),                   # folded heads+decoder b
        ],
        out_specs=pl.BlockSpec((1, 1, LANE), lambda b: (b, 0, 0)),
        compiler_params=pltpu.CompilerParams(dimension_semantics=("parallel",)),
    )(x_outer, x_center,
      packed["w_tcn_outer"], packed["b_tcn_outer"],
      packed["w_tcn_center"], packed["b_tcn_center"],
      packed["w_dec"], packed["b_dec"])
    return out[:, 0, :]


# ----------------------------- parameter packing -----------------------------

def pack_params(params, C):
    """Fold PyTorch-style per-block params into the fused kernel's layout."""
    def pack_tcn(blocks):
        W = jnp.stack([
            jnp.stack([jnp.concatenate([blk["w10"], blk["w11"]], axis=0),
                       jnp.concatenate([blk["w20"], blk["w21"]], axis=0)], axis=0)
            for blk in blocks], axis=0).astype(jnp.bfloat16)          # (n, 2, 2C, C)
        Bb = jnp.stack([jnp.stack([blk["b1"], blk["b2"]], axis=0)
                        for blk in blocks], axis=0).astype(jnp.float32)  # (n, 2, 1, C)
        dil = tuple(int(blk["dilation"]) for blk in blocks)
        return W, Bb, dil

    w_out, b_out, dil_out = pack_tcn(params["tcn_outer"])
    w_ctr, b_ctr, dil_ctr = pack_tcn(params["tcn_center"])

    # Fold the three heads and the decoder into one (3C, out) matrix:
    #   y = cat(m_b@Wo+bo, m_c@Wc+bc, m_h@Wo+bo) @ Wd + bd
    #     = m_b@(Wo@Wd[:10]) + m_c@(Wc@Wd[10:90]) + m_h@(Wo@Wd[90:]) + b_full
    wd = params["w_dec"].astype(jnp.float32)        # (100, out)
    out = wd.shape[1]
    Wo, bo = params["w_outer"], params["b_outer"]   # (C, 10), (1, 10)
    Wc, bc = params["w_center"], params["b_center"] # (C, 80), (1, 80)
    A_before = Wo @ wd[0:10]                        # (C, out)
    A_center = Wc @ wd[10:90]                       # (C, out)
    A_behind = Wo @ wd[90:100]                      # (C, out)
    W_full = jnp.concatenate([A_before, A_center, A_behind], axis=0)   # (3C, out)
    b_full = (bo @ wd[0:10] + bc @ wd[10:90] + bo @ wd[90:100]
              + params["b_dec"])                                       # (1, out)

    # pad to LANE output columns -> unmasked lane-dense stores in the kernel
    W_full = jnp.pad(W_full, ((0, 0), (0, LANE - out))).astype(jnp.float32)
    b_full = jnp.pad(b_full, ((0, 0), (0, LANE - out))).astype(jnp.float32)

    return dict(
        w_tcn_outer=w_out, b_tcn_outer=b_out, dil_outer=dil_out,
        w_tcn_center=w_ctr, b_tcn_center=b_ctr, dil_center=dil_ctr,
        w_dec=W_full, b_dec=b_full,
    )


# ----------------------------- model glue ------------------------------------

def cps_tcn_forward(token_ids, emb_table, packed, output_size):
    # Encoder: frozen BertModel('bert-base-uncased') has no Pallas equivalent;
    # a deterministic embedding-table lookup stands in for it.
    # TODO(synk): real module runs a full frozen BERT encoder here.
    B, S, T = token_ids.shape
    emb = emb_table[token_ids]                       # (B, S, T, C)
    C = emb.shape[-1]
    # divide_data_for_tcn: helper not given in the source; assume the sentence
    # axis is split into before / center / behind thirds, each flattened to (B, L, C).
    # TODO(synk): divide_data_for_tcn definition unavailable, thirds assumed.
    g = S // 3
    L = g * T
    tokens_before = emb[:, :g].reshape(B, L, C)
    tokens_center = emb[:, g:2 * g].reshape(B, L, C)
    tokens_behind = emb[:, 2 * g:3 * g].reshape(B, L, C)

    # before & behind share tcn_outer / linear_for_outer -> stack along the
    # sequence axis and run once through the shared TCN as a (2L, C) slab.
    x_outer = jnp.concatenate([tokens_before, tokens_behind], axis=1)  # (B, 2L, C)
    y_pad = cps_tcn_fused(x_outer, tokens_center, packed)              # (B, LANE)
    return y_pad[:, :output_size]


def init_tcn_params(key, C, num_levels, scale=0.05):
    blocks = []
    for i in range(num_levels):
        key, *ks = jax.random.split(key, 7)
        blocks.append(dict(
            dilation=2 ** i,
            w10=scale * jax.random.normal(ks[0], (C, C), jnp.float32),
            w11=scale * jax.random.normal(ks[1], (C, C), jnp.float32),
            b1=scale * jax.random.normal(ks[2], (1, C), jnp.float32),
            w20=scale * jax.random.normal(ks[3], (C, C), jnp.float32),
            w21=scale * jax.random.normal(ks[4], (C, C), jnp.float32),
            b2=scale * jax.random.normal(ks[5], (1, C), jnp.float32),
        ))
    return key, blocks


# ----------------------------- pure-JAX reference -----------------------------

def reference_forward(token_ids, emb_table, params, output_size):
    B, S, T = token_ids.shape
    emb = emb_table[token_ids]
    C = emb.shape[-1]
    g = S // 3
    L = g * T
    tb = emb[:, :g].reshape(B, L, C)
    tc = emb[:, g:2 * g].reshape(B, L, C)
    th = emb[:, 2 * g:3 * g].reshape(B, L, C)

    def run_tcn(x, blocks):
        N, L_, C_ = x.shape
        h = x
        for blk in blocks:
            d = blk["dilation"]
            res = h
            for (w0, w1, b) in ((blk["w10"], blk["w11"], blk["b1"]),
                                (blk["w20"], blk["w21"], blk["b2"])):
                if d < L_:
                    hs = jnp.concatenate(
                        [jnp.zeros((N, d, C_), jnp.float32), h[:, :L_ - d]], axis=1)
                else:
                    hs = jnp.zeros_like(h)
                w = jnp.concatenate([w0, w1], axis=0).astype(jnp.bfloat16)
                hcat = jnp.concatenate([hs, h], axis=-1).astype(jnp.bfloat16)
                h = jnp.maximum(
                    jnp.einsum("nlk,kc->nlc", hcat, w,
                               preferred_element_type=jnp.float32) + b, 0.0)
            h = jnp.maximum(h + res, 0.0)
        return h

    yb = run_tcn(tb, params["tcn_outer"]).mean(axis=1) @ params["w_outer"] + params["b_outer"]
    yc = run_tcn(tc, params["tcn_center"]).mean(axis=1) @ params["w_center"] + params["b_center"]
    yh = run_tcn(th, params["tcn_outer"]).mean(axis=1) @ params["w_outer"] + params["b_outer"]
    y = jnp.concatenate([yb, yc, yh], axis=1)
    return y @ params["w_dec"] + params["b_dec"]


if __name__ == "__main__":
    key = jax.random.PRNGKey(0)

    # small, module-consistent shapes
    B, S, T = 2, 6, 4          # batch, sentences, tokens per sentence
    C = 128                    # embedding dim (stand-in for BERT's 768)
    output_size = 11
    levels = [2, 1]            # [center TCN depth, outer TCN depth]
    vocab = 64

    params = {}
    key, k_emb = jax.random.split(key)
    params["emb_table"] = 0.1 * jax.random.normal(k_emb, (vocab, C), jnp.float32)

    key, params["tcn_center"] = init_tcn_params(key, C, levels[0])
    key, params["tcn_outer"] = init_tcn_params(key, C, levels[1])

    key, k1, k2, k3 = jax.random.split(key, 4)
    params["w_center"] = 0.05 * jax.random.normal(k1, (C, 80), jnp.float32)   # linear_for_center
    params["b_center"] = jnp.zeros((1, 80), jnp.float32)
    params["w_outer"] = 0.05 * jax.random.normal(k2, (C, 10), jnp.float32)    # linear_for_outer
    params["b_outer"] = jnp.zeros((1, 10), jnp.float32)
    # decoder init_weights(): weight ~ N(0, 0.01), bias = 0
    params["w_dec"] = 0.01 * jax.random.normal(k3, (100, output_size), jnp.float32)
    params["b_dec"] = jnp.zeros((1, output_size), jnp.float32)

    key, k_tok = jax.random.split(key)
    token_ids = jax.random.randint(k_tok, (B, S, T), 0, vocab)

    packed = pack_params(params, C)
    emb_table = params["emb_table"]

    fwd = jax.jit(lambda tok: cps_tcn_forward(tok, emb_table, packed, output_size))
    y = jax.block_until_ready(fwd(token_ids))

    y_ref = jax.block_until_ready(
        reference_forward(token_ids, emb_table, params, output_size))

    assert y.shape == (B, output_size), y.shape
    assert bool(jnp.all(jnp.isfinite(y)))
    assert bool(jnp.allclose(y, y_ref, atol=2e-3, rtol=2e-3)), \
        float(jnp.max(jnp.abs(y - y_ref)))
    print("KERNEL_OK")
</pallas_src>

<mosaic_0001>
module attributes {stable_mosaic.version = 11 : i64} {
  func.func @kernel(%arg0: i32, %arg1: memref<1x16x128xf32, #tpu.memory_space<vmem>>, %arg2: memref<1x8x128xf32, #tpu.memory_space<vmem>>, %arg3: memref<1x2x256x128xbf16, #tpu.memory_space<vmem>>, %arg4: memref<1x2x1x128xf32, #tpu.memory_space<vmem>>, %arg5: memref<2x2x256x128xbf16, #tpu.memory_space<vmem>>, %arg6: memref<2x2x1x128xf32, #tpu.memory_space<vmem>>, %arg7: memref<384x128xf32, #tpu.memory_space<vmem>>, %arg8: memref<1x128xf32, #tpu.memory_space<vmem>>, %arg9: memref<1x1x128xf32, #tpu.memory_space<vmem>>) attributes {dimension_semantics = [#tpu.dimension_semantics<parallel>], iteration_bounds = array<i64: 2>, scalar_prefetch = 0 : i64, scratch_operands = 0 : i64, tpu.core_type = #tpu.core_type<tc>, window_params = [{transform_indices = @transform_0, window_bounds = array<i64: 1, 16, 128>}, {transform_indices = @transform_1, window_bounds = array<i64: 1, 8, 128>}, {pipeline_mode = #tpu.pipeline_mode<synchronous>, transform_indices = @transform_2, window_bounds = array<i64: 1, 2, 256, 128>}, {pipeline_mode = #tpu.pipeline_mode<synchronous>, transform_indices = @transform_3, window_bounds = array<i64: 1, 2, 1, 128>}, {pipeline_mode = #tpu.pipeline_mode<synchronous>, transform_indices = @transform_4, window_bounds = array<i64: 2, 2, 256, 128>}, {pipeline_mode = #tpu.pipeline_mode<synchronous>, transform_indices = @transform_5, window_bounds = array<i64: 2, 2, 1, 128>}, {pipeline_mode = #tpu.pipeline_mode<synchronous>, transform_indices = @transform_6, window_bounds = array<i64: 384, 128>}, {pipeline_mode = #tpu.pipeline_mode<synchronous>, transform_indices = @transform_7, window_bounds = array<i64: 1, 128>}, {transform_indices = @transform_8, window_bounds = array<i64: 1, 1, 128>}]} {
    %c0 = arith.constant 0 : index
    %c0_0 = arith.constant 0 : index
    %c0_1 = arith.constant 0 : index
    %0 = vector.load %arg1[%c0, %c0_0, %c0_1] : memref<1x16x128xf32, #tpu.memory_space<vmem>>, vector<1x16x128xf32>
    %1 = vector.shape_cast %0 : vector<1x16x128xf32> to vector<16x128xf32>
    %2 = tpu.iota {dimensions = array<i32: 0>} : vector<16x128xi32>
    %c8_i32 = arith.constant 8 : i32
    %c0_i32 = arith.constant 0 : i32
    %3 = arith.cmpi eq, %c8_i32, %c0_i32 : i32
    %c1_i32 = arith.constant 1 : i32
    %4 = arith.select %3, %c1_i32, %c8_i32 : i32
    %5 = vector.broadcast %4 : i32 to vector<16x128xi32>
    %6 = arith.remsi %2, %5 : vector<16x128xi32>
    %c0_i32_2 = arith.constant 0 : i32
    %7 = vector.broadcast %c0_i32_2 : i32 to vector<16x128xi32>
    %8 = arith.cmpi ne, %6, %7 : vector<16x128xi32>
    %c0_i32_3 = arith.constant 0 : i32
    %9 = vector.broadcast %c0_i32_3 : i32 to vector<16x128xi32>
    %10 = arith.cmpi slt, %6, %9 : vector<16x128xi32>
    %c0_i32_4 = arith.constant 0 : i32
    %11 = arith.cmpi slt, %4, %c0_i32_4 : i32
    %12 = vector.broadcast %11 : i1 to vector<16x128xi1>
    %13 = vector.broadcast %12 : vector<16x128xi1> to vector<16x128xi1>
    %14 = arith.xori %10, %13 : vector<16x128xi1>
    %15 = arith.andi %14, %8 : vector<16x128xi1>
    %16 = vector.broadcast %4 : i32 to vector<16x128xi32>
    %17 = arith.addi %6, %16 : vector<16x128xi32>
    %18 = arith.select %15, %17, %6 : vector<16x128xi1>, vector<16x128xi32>
    %cst = arith.constant 0.000000e+00 : f32
    %19 = vector.broadcast %cst : f32 to vector<1x128xf32>
    %20 = vector.extract_strided_slice %1 {offsets = [0, 0], sizes = [15, 128], strides = [1, 1]} : vector<16x128xf32> to vector<15x128xf32>
    %21 = tpu.concatenate %19, %20 in 0 : vector<1x128xf32>, vector<15x128xf32> -> vector<16x128xf32>
    %c1_i32_5 = arith.constant 1 : i32
    %22 = vector.broadcast %c1_i32_5 : i32 to vector<16x128xi32>
    %23 = arith.cmpi sge, %18, %22 : vector<16x128xi32>
    %cst_6 = arith.constant 0.000000e+00 : f32
    %24 = vector.broadcast %cst_6 : f32 to vector<16x128xf32>
    %25 = arith.select %23, %21, %24 : vector<16x128xi1>, vector<16x128xf32>
    %26 = tpu.concatenate %25, %1 in 1 : vector<16x128xf32>, vector<16x128xf32> -> vector<16x256xf32>
    %27 = arith.truncf %26 : vector<16x256xf32> to vector<16x256xbf16>
    %c0_7 = arith.constant 0 : index
    %c0_8 = arith.constant 0 : index
    %c0_9 = arith.constant 0 : index
    %c0_10 = arith.constant 0 : index
    %28 = vector.load %arg3[%c0_7, %c0_8, %c0_9, %c0_10] : memref<1x2x256x128xbf16, #tpu.memory_space<vmem>>, vector<1x1x256x128xbf16>
    %29 = vector.shape_cast %28 : vector<1x1x256x128xbf16> to vector<256x128xbf16>
    %cst_11 = arith.constant dense<0.000000e+00> : vector<16x128xf32>
    %30 = tpu.matmul %27, %29, %cst_11 {dimension_numbers = #tpu.dot_dimension_numbers<[1], [0], [0], [1], [0, 0, 1, 1], [], []>} : vector<16x256xbf16>, vector<256x128xbf16>, vector<16x128xf32> -> vector<16x128xf32>
    %c0_12 = arith.constant 0 : index
    %c0_13 = arith.constant 0 : index
    %c0_14 = arith.constant 0 : index
    %c0_15 = arith.constant 0 : index
    %31 = vector.load %arg4[%c0_12, %c0_13, %c0_14, %c0_15] : memref<1x2x1x128xf32, #tpu.memory_space<vmem>>, vector<1x1x1x128xf32>
    %32 = vector.shape_cast %31 : vector<1x1x1x128xf32> to vector<1x128xf32>
    %33 = vector.broadcast %32 : vector<1x128xf32> to vector<16x128xf32>
    %34 = arith.addf %30, %33 : vector<16x128xf32>
    %cst_16 = arith.constant 0.000000e+00 : f32
    %35 = vector.broadcast %cst_16 : f32 to vector<16x128xf32>
    %36 = arith.maximumf %34, %35 : vector<16x128xf32>
    %cst_17 = arith.constant 0.000000e+00 : f32
    %37 = vector.broadcast %cst_17 : f32 to vector<1x128xf32>
    %38 = vector.extract_strided_slice %36 {offsets = [0, 0], sizes = [15, 128], strides = [1, 1]} : vector<16x128xf32> to vector<15x128xf32>
    %39 = tpu.concatenate %37, %38 in 0 : vector<1x128xf32>, vector<15x128xf32> -> vector<16x128xf32>
    %c1_i32_18 = arith.constant 1 : i32
    %40 = vector.broadcast %c1_i32_18 : i32 to vector<16x128xi32>
    %41 = arith.cmpi sge, %18, %40 : vector<16x128xi32>
    %cst_19 = arith.constant 0.000000e+00 : f32
    %42 = vector.broadcast %cst_19 : f32 to vector<16x128xf32>
    %43 = arith.select %41, %39, %42 : vector<16x128xi1>, vector<16x128xf32>
    %44 = tpu.concatenate %43, %36 in 1 : vector<16x128xf32>, vector<16x128xf32> -> vector<16x256xf32>
    %45 = arith.truncf %44 : vector<16x256xf32> to vector<16x256xbf16>
    %c0_20 = arith.constant 0 : index
    %c1 = arith.constant 1 : index
    %c0_21 = arith.constant 0 : index
    %c0_22 = arith.constant 0 : index
    %46 = vector.load %arg3[%c0_20, %c1, %c0_21, %c0_22] : memref<1x2x256x128xbf16, #tpu.memory_space<vmem>>, vector<1x1x256x128xbf16>
    %47 = vector.shape_cast %46 : vector<1x1x256x128xbf16> to vector<256x128xbf16>
    %cst_23 = arith.constant dense<0.000000e+00> : vector<16x128xf32>
    %48 = tpu.matmul %45, %47, %cst_23 {dimension_numbers = #tpu.dot_dimension_numbers<[1], [0], [0], [1], [0, 0, 1, 1], [], []>} : vector<16x256xbf16>, vector<256x128xbf16>, vector<16x128xf32> -> vector<16x128xf32>
    %c0_24 = arith.constant 0 : index
    %c1_25 = arith.constant 1 : index
    %c0_26 = arith.constant 0 : index
    %c0_27 = arith.constant 0 : index
    %49 = vector.load %arg4[%c0_24, %c1_25, %c0_26, %c0_27] : memref<1x2x1x128xf32, #tpu.memory_space<vmem>>, vector<1x1x1x128xf32>
    %50 = vector.shape_cast %49 : vector<1x1x1x128xf32> to vector<1x128xf32>
    %51 = vector.broadcast %50 : vector<1x128xf32> to vector<16x128xf32>
    %52 = arith.addf %48, %51 : vector<16x128xf32>
    %cst_28 = arith.constant 0.000000e+00 : f32
    %53 = vector.broadcast %cst_28 : f32 to vector<16x128xf32>
    %54 = arith.maximumf %52, %53 : vector<16x128xf32>
    %55 = arith.addf %54, %1 : vector<16x128xf32>
    %cst_29 = arith.constant 0.000000e+00 : f32
    %56 = vector.broadcast %cst_29 : f32 to vector<16x128xf32>
    %57 = arith.maximumf %55, %56 : vector<16x128xf32>
    %c0_30 = arith.constant 0 : index
    %c0_31 = arith.constant 0 : index
    %c0_32 = arith.constant 0 : index
    %58 = vector.load %arg2[%c0_30, %c0_31, %c0_32] : memref<1x8x128xf32, #tpu.memory_space<vmem>>, vector<1x8x128xf32>
    %59 = vector.shape_cast %58 : vector<1x8x128xf32> to vector<8x128xf32>
    %60 = tpu.iota {dimensions = array<i32: 0>} : vector<8x128xi32>
    %c8_i32_33 = arith.constant 8 : i32
    %c0_i32_34 = arith.constant 0 : i32
    %61 = arith.cmpi eq, %c8_i32_33, %c0_i32_34 : i32
    %c1_i32_35 = arith.constant 1 : i32
    %62 = arith.select %61, %c1_i32_35, %c8_i32_33 : i32
    %63 = vector.broadcast %62 : i32 to vector<8x128xi32>
    %64 = arith.remsi %60, %63 : vector<8x128xi32>
    %c0_i32_36 = arith.constant 0 : i32
    %65 = vector.broadcast %c0_i32_36 : i32 to vector<8x128xi32>
    %66 = arith.cmpi ne, %64, %65 : vector<8x128xi32>
    %c0_i32_37 = arith.constant 0 : i32
    %67 = vector.broadcast %c0_i32_37 : i32 to vector<8x128xi32>
    %68 = arith.cmpi slt, %64, %67 : vector<8x128xi32>
    %c0_i32_38 = arith.constant 0 : i32
    %69 = arith.cmpi slt, %62, %c0_i32_38 : i32
    %70 = vector.broadcast %69 : i1 to vector<8x128xi1>
    %71 = vector.broadcast %70 : vector<8x128xi1> to vector<8x128xi1>
    %72 = arith.xori %68, %71 : vector<8x128xi1>
    %73 = arith.andi %72, %66 : vector<8x128xi1>
    %74 = vector.broadcast %62 : i32 to vector<8x128xi32>
    %75 = arith.addi %64, %74 : vector<8x128xi32>
    %76 = arith.select %73, %75, %64 : vector<8x128xi1>, vector<8x128xi32>
    %cst_39 = arith.constant 0.000000e+00 : f32
    %77 = vector.broadcast %cst_39 : f32 to vector<1x128xf32>
    %78 = vector.extract_strided_slice %59 {offsets = [0, 0], sizes = [7, 128], strides = [1, 1]} : vector<8x128xf32> to vector<7x128xf32>
    %79 = tpu.concatenate %77, %78 in 0 : vector<1x128xf32>, vector<7x128xf32> -> vector<8x128xf32>
    %c1_i32_40 = arith.constant 1 : i32
    %80 = vector.broadcast %c1_i32_40 : i32 to vector<8x128xi32>
    %81 = arith.cmpi sge, %76, %80 : vector<8x128xi32>
    %cst_41 = arith.constant 0.000000e+00 : f32
    %82 = vector.broadcast %cst_41 : f32 to vector<8x128xf32>
    %83 = arith.select %81, %79, %82 : vector<8x128xi1>, vector<8x128xf32>
    %84 = tpu.concatenate %83, %59 in 1 : vector<8x128xf32>, vector<8x128xf32> -> vector<8x256xf32>
    %85 = arith.truncf %84 : vector<8x256xf32> to vector<8x256xbf16>
    %c0_42 = arith.constant 0 : index
    %c0_43 = arith.constant 0 : index
    %c0_44 = arith.constant 0 : index
    %c0_45 = arith.constant 0 : index
    %86 = vector.load %arg5[%c0_42, %c0_43, %c0_44, %c0_45] : memref<2x2x256x128xbf16, #tpu.memory_space<vmem>>, vector<1x1x256x128xbf16>
    %87 = vector.shape_cast %86 : vector<1x1x256x128xbf16> to vector<256x128xbf16>
    %cst_46 = arith.constant dense<0.000000e+00> : vector<8x128xf32>
    %88 = tpu.matmul %85, %87, %cst_46 {dimension_numbers = #tpu.dot_dimension_numbers<[1], [0], [0], [1], [0, 0, 1, 1], [], []>} : vector<8x256xbf16>, vector<256x128xbf16>, vector<8x128xf32> -> vector<8x128xf32>
    %c0_47 = arith.constant 0 : index
    %c0_48 = arith.constant 0 : index
    %c0_49 = arith.constant 0 : index
    %c0_50 = arith.constant 0 : index
    %89 = vector.load %arg6[%c0_47, %c0_48, %c0_49, %c0_50] : memref<2x2x1x128xf32, #tpu.memory_space<vmem>>, vector<1x1x1x128xf32>
    %90 = vector.shape_cast %89 : vector<1x1x1x128xf32> to vector<1x128xf32>
    %91 = vector.broadcast %90 : vector<1x128xf32> to vector<8x128xf32>
    %92 = arith.addf %88, %91 : vector<8x128xf32>
    %cst_51 = arith.constant 0.000000e+00 : f32
    %93 = vector.broadcast %cst_51 : f32 to vector<8x128xf32>
    %94 = arith.maximumf %92, %93 : vector<8x128xf32>
    %cst_52 = arith.constant 0.000000e+00 : f32
    %95 = vector.broadcast %cst_52 : f32 to vector<1x128xf32>
    %96 = vector.extract_strided_slice %94 {offsets = [0, 0], sizes = [7, 128], strides = [1, 1]} : vector<8x128xf32> to vector<7x128xf32>
    %97 = tpu.concatenate %95, %96 in 0 : vector<1x128xf32>, vector<7x128xf32> -> vector<8x128xf32>
    %c1_i32_53 = arith.constant 1 : i32
    %98 = vector.broadcast %c1_i32_53 : i32 to vector<8x128xi32>
    %99 = arith.cmpi sge, %76, %98 : vector<8x128xi32>
    %cst_54 = arith.constant 0.000000e+00 : f32
    %100 = vector.broadcast %cst_54 : f32 to vector<8x128xf32>
    %101 = arith.select %99, %97, %100 : vector<8x128xi1>, vector<8x128xf32>
    %102 = tpu.concatenate %101, %94 in 1 : vector<8x128xf32>, vector<8x128xf32> -> vector<8x256xf32>
    %103 = arith.truncf %102 : vector<8x256xf32> to vector<8x256xbf16>
    %c0_55 = arith.constant 0 : index
    %c1_56 = arith.constant 1 : index
    %c0_57 = arith.constant 0 : index
    %c0_58 = arith.constant 0 : index
    %104 = vector.load %arg5[%c0_55, %c1_56, %c0_57, %c0_58] : memref<2x2x256x128xbf16, #tpu.memory_space<vmem>>, vector<1x1x256x128xbf16>
    %105 = vector.shape_cast %104 : vector<1x1x256x128xbf16> to vector<256x128xbf16>
    %cst_59 = arith.constant dense<0.000000e+00> : vector<8x128xf32>
    %106 = tpu.matmul %103, %105, %cst_59 {dimension_numbers = #tpu.dot_dimension_numbers<[1], [0], [0], [1], [0, 0, 1, 1], [], []>} : vector<8x256xbf16>, vector<256x128xbf16>, vector<8x128xf32> -> vector<8x128xf32>
    %c0_60 = arith.constant 0 : index
    %c1_61 = arith.constant 1 : index
    %c0_62 = arith.constant 0 : index
    %c0_63 = arith.constant 0 : index
    %107 = vector.load %arg6[%c0_60, %c1_61, %c0_62, %c0_63] : memref<2x2x1x128xf32, #tpu.memory_space<vmem>>, vector<1x1x1x128xf32>
    %108 = vector.shape_cast %107 : vector<1x1x1x128xf32> to vector<1x128xf32>
    %109 = vector.broadcast %108 : vector<1x128xf32> to vector<8x128xf32>
    %110 = arith.addf %106, %109 : vector<8x128xf32>
    %cst_64 = arith.constant 0.000000e+00 : f32
    %111 = vector.broadcast %cst_64 : f32 to vector<8x128xf32>
    %112 = arith.maximumf %110, %111 : vector<8x128xf32>
    %113 = arith.addf %112, %59 : vector<8x128xf32>
    %cst_65 = arith.constant 0.000000e+00 : f32
    %114 = vector.broadcast %cst_65 : f32 to vector<8x128xf32>
    %115 = arith.maximumf %113, %114 : vector<8x128xf32>
    %cst_66 = arith.constant 0.000000e+00 : f32
    %116 = vector.broadcast %cst_66 : f32 to vector<2x128xf32>
    %117 = vector.extract_strided_slice %115 {offsets = [0, 0], sizes = [6, 128], strides = [1, 1]} : vector<8x128xf32> to vector<6x128xf32>
    %118 = tpu.concatenate %116, %117 in 0 : vector<2x128xf32>, vector<6x128xf32> -> vector<8x128xf32>
    %c2_i32 = arith.constant 2 : i32
    %119 = vector.broadcast %c2_i32 : i32 to vector<8x128xi32>
    %120 = arith.cmpi sge, %76, %119 : vector<8x128xi32>
    %cst_67 = arith.constant 0.000000e+00 : f32
    %121 = vector.broadcast %cst_67 : f32 to vector<8x128xf32>
    %122 = arith.select %120, %118, %121 : vector<8x128xi1>, vector<8x128xf32>
    %123 = tpu.concatenate %122, %115 in 1 : vector<8x128xf32>, vector<8x128xf32> -> vector<8x256xf32>
    %124 = arith.truncf %123 : vector<8x256xf32> to vector<8x256xbf16>
    %c1_68 = arith.constant 1 : index
    %c0_69 = arith.constant 0 : index
    %c0_70 = arith.constant 0 : index
    %c0_71 = arith.constant 0 : index
    %125 = vector.load %arg5[%c1_68, %c0_69, %c0_70, %c0_71] : memref<2x2x256x128xbf16, #tpu.memory_space<vmem>>, vector<1x1x256x128xbf16>
    %126 = vector.shape_cast %125 : vector<1x1x256x128xbf16> to vector<256x128xbf16>
    %cst_72 = arith.constant dense<0.000000e+00> : vector<8x128xf32>
    %127 = tpu.matmul %124, %126, %cst_72 {dimension_numbers = #tpu.dot_dimension_numbers<[1], [0], [0], [1], [0, 0, 1, 1], [], []>} : vector<8x256xbf16>, vector<256x128xbf16>, vector<8x128xf32> -> vector<8x128xf32>
    %c1_73 = arith.constant 1 : index
    %c0_74 = arith.constant 0 : index
    %c0_75 = arith.constant 0 : index
    %c0_76 = arith.constant 0 : index
    %128 = vector.load %arg6[%c1_73, %c0_74, %c0_75, %c0_76] : memref<2x2x1x128xf32, #tpu.memory_space<vmem>>, vector<1x1x1x128xf32>
    %129 = vector.shape_cast %128 : vector<1x1x1x128xf32> to vector<1x128xf32>
    %130 = vector.broadcast %129 : vector<1x128xf32> to vector<8x128xf32>
    %131 = arith.addf %127, %130 : vector<8x128xf32>
    %cst_77 = arith.constant 0.000000e+00 : f32
    %132 = vector.broadcast %cst_77 : f32 to vector<8x128xf32>
    %133 = arith.maximumf %131, %132 : vector<8x128xf32>
    %cst_78 = arith.constant 0.000000e+00 : f32
    %134 = vector.broadcast %cst_78 : f32 to vector<2x128xf32>
    %135 = vector.extract_strided_slice %133 {offsets = [0, 0], sizes = [6, 128], strides = [1, 1]} : vector<8x128xf32> to vector<6x128xf32>
    %136 = tpu.concatenate %134, %135 in 0 : vector<2x128xf32>, vector<6x128xf32> -> vector<8x128xf32>
    %c2_i32_79 = arith.constant 2 : i32
    %137 = vector.broadcast %c2_i32_79 : i32 to vector<8x128xi32>
    %138 = arith.cmpi sge, %76, %137 : vector<8x128xi32>
    %cst_80 = arith.constant 0.000000e+00 : f32
    %139 = vector.broadcast %cst_80 : f32 to vector<8x128xf32>
    %140 = arith.select %138, %136, %139 : vector<8x128xi1>, vector<8x128xf32>
    %141 = tpu.concatenate %140, %133 in 1 : vector<8x128xf32>, vector<8x128xf32> -> vector<8x256xf32>
    %142 = arith.truncf %141 : vector<8x256xf32> to vector<8x256xbf16>
    %c1_81 = arith.constant 1 : index
    %c1_82 = arith.constant 1 : index
    %c0_83 = arith.constant 0 : index
    %c0_84 = arith.constant 0 : index
    %143 = vector.load %arg5[%c1_81, %c1_82, %c0_83, %c0_84] : memref<2x2x256x128xbf16, #tpu.memory_space<vmem>>, vector<1x1x256x128xbf16>
    %144 = vector.shape_cast %143 : vector<1x1x256x128xbf16> to vector<256x128xbf16>
    %cst_85 = arith.constant dense<0.000000e+00> : vector<8x128xf32>
    %145 = tpu.matmul %142, %144, %cst_85 {dimension_numbers = #tpu.dot_dimension_numbers<[1], [0], [0], [1], [0, 0, 1, 1], [], []>} : vector<8x256xbf16>, vector<256x128xbf16>, vector<8x128xf32> -> vector<8x128xf32>
    %c1_86 = arith.constant 1 : index
    %c1_87 = arith.constant 1 : index
    %c0_88 = arith.constant 0 : index
    %c0_89 = arith.constant 0 : index
    %146 = vector.load %arg6[%c1_86, %c1_87, %c0_88, %c0_89] : memref<2x2x1x128xf32, #tpu.memory_space<vmem>>, vector<1x1x1x128xf32>
    %147 = vector.shape_cast %146 : vector<1x1x1x128xf32> to vector<1x128xf32>
    %148 = vector.broadcast %147 : vector<1x128xf32> to vector<8x128xf32>
    %149 = arith.addf %145, %148 : vector<8x128xf32>
    %cst_90 = arith.constant 0.000000e+00 : f32
    %150 = vector.broadcast %cst_90 : f32 to vector<8x128xf32>
    %151 = arith.maximumf %149, %150 : vector<8x128xf32>
    %152 = arith.addf %151, %115 : vector<8x128xf32>
    %cst_91 = arith.constant 0.000000e+00 : f32
    %153 = vector.broadcast %cst_91 : f32 to vector<8x128xf32>
    %154 = arith.maximumf %152, %153 : vector<8x128xf32>
    %155 = vector.extract_strided_slice %57 {offsets = [0, 0], sizes = [8, 128], strides = [1, 1]} : vector<16x128xf32> to vector<8x128xf32>
    %cst_92 = arith.constant dense<0.000000e+00> : vector<128xf32>
    %156 = vector.multi_reduction <add>, %155, %cst_92 [0] : vector<8x128xf32> to vector<128xf32>
    %157 = vector.shape_cast %156 : vector<128xf32> to vector<1x128xf32>
    %cst_93 = arith.constant 8.000000e+00 : f32
    %158 = vector.broadcast %cst_93 : f32 to vector<1x128xf32>
    %159 = arith.divf %157, %158 : vector<1x128xf32>
    %160 = vector.extract_strided_slice %57 {offsets = [8, 0], sizes = [8, 128], strides = [1, 1]} : vector<16x128xf32> to vector<8x128xf32>
    %cst_94 = arith.constant dense<0.000000e+00> : vector<128xf32>
    %161 = vector.multi_reduction <add>, %160, %cst_94 [0] : vector<8x128xf32> to vector<128xf32>
    %162 = vector.shape_cast %161 : vector<128xf32> to vector<1x128xf32>
    %cst_95 = arith.constant 8.000000e+00 : f32
    %163 = vector.broadcast %cst_95 : f32 to vector<1x128xf32>
    %164 = arith.divf %162, %163 : vector<1x128xf32>
    %cst_96 = arith.constant dense<0.000000e+00> : vector<128xf32>
    %165 = vector.multi_reduction <add>, %154, %cst_96 [0] : vector<8x128xf32> to vector<128xf32>
    %166 = vector.shape_cast %165 : vector<128xf32> to vector<1x128xf32>
    %cst_97 = arith.constant 8.000000e+00 : f32
    %167 = vector.broadcast %cst_97 : f32 to vector<1x128xf32>
    %168 = arith.divf %166, %167 : vector<1x128xf32>
    %169 = tpu.concatenate %159, %168, %164 in 1 : vector<1x128xf32>, vector<1x128xf32>, vector<1x128xf32> -> vector<1x384xf32>
    %c0_98 = arith.constant 0 : index
    %c0_99 = arith.constant 0 : index
    %170 = vector.load %arg7[%c0_98, %c0_99] : memref<384x128xf32, #tpu.memory_space<vmem>>, vector<384x128xf32>
    %cst_100 = arith.constant dense<0.000000e+00> : vector<1x128xf32>
    %171 = tpu.matmul %169, %170, %cst_100 {dimension_numbers = #tpu.dot_dimension_numbers<[1], [0], [0], [1], [0, 0, 1, 1], [], []>} : vector<1x384xf32>, vector<384x128xf32>, vector<1x128xf32> -> vector<1x128xf32>
    %c0_101 = arith.constant 0 : index
    %c0_102 = arith.constant 0 : index
    %172 = vector.load %arg8[%c0_101, %c0_102] : memref<1x128xf32, #tpu.memory_space<vmem>>, vector<1x128xf32>
    %173 = arith.addf %171, %172 : vector<1x128xf32>
    %c0_103 = arith.constant 0 : index
    %c0_104 = arith.constant 0 : index
    %c0_105 = arith.constant 0 : index
    %174 = vector.load %arg9[%c0_103, %c0_104, %c0_105] : memref<1x1x128xf32, #tpu.memory_space<vmem>>, vector<1x1x128xf32>
    %175 = vector.shape_cast %174 : vector<1x1x128xf32> to vector<1x128xf32>
    %176 = vector.shape_cast %173 : vector<1x128xf32> to vector<1x1x128xf32>
    tpu.vector_store %arg9[%c0_103, %c0_104, %c0_105], %176 {strides = array<i32>} : memref<1x1x128xf32, #tpu.memory_space<vmem>>, vector<1x1x128xf32>,
    return
  }
  func.func @transform_0(%arg0: i32) -> (i32, i32, i32) {
    %c0_i32 = arith.constant 0 : i32
    %c0_i32_0 = arith.constant 0 : i32
    %c0_i32_1 = arith.constant 0 : i32
    return %arg0, %c0_i32, %c0_i32_0 : i32, i32, i32
  }
  func.func @transform_1(%arg0: i32) -> (i32, i32, i32) {
    %c0_i32 = arith.constant 0 : i32
    %c0_i32_0 = arith.constant 0 : i32
    %c0_i32_1 = arith.constant 0 : i32
    return %arg0, %c0_i32, %c0_i32_0 : i32, i32, i32
  }
  func.func @transform_2(%arg0: i32) -> (i32, i32, i32, i32) {
    %c0_i32 = arith.constant 0 : i32
    %c0_i32_0 = arith.constant 0 : i32
    %c0_i32_1 = arith.constant 0 : i32
    %c0_i32_2 = arith.constant 0 : i32
    %c0_i32_3 = arith.constant 0 : i32
    return %c0_i32, %c0_i32_0, %c0_i32_1, %c0_i32_2 : i32, i32, i32, i32
  }
  func.func @transform_3(%arg0: i32) -> (i32, i32, i32, i32) {
    %c0_i32 = arith.constant 0 : i32
    %c0_i32_0 = arith.constant 0 : i32
    %c0_i32_1 = arith.constant 0 : i32
    %c0_i32_2 = arith.constant 0 : i32
    %c0_i32_3 = arith.constant 0 : i32
    return %c0_i32, %c0_i32_0, %c0_i32_1, %c0_i32_2 : i32, i32, i32, i32
  }
  func.func @transform_4(%arg0: i32) -> (i32, i32, i32, i32) {
    %c0_i32 = arith.constant 0 : i32
    %c0_i32_0 = arith.constant 0 : i32
    %c0_i32_1 = arith.constant 0 : i32
    %c0_i32_2 = arith.constant 0 : i32
    %c0_i32_3 = arith.constant 0 : i32
    return %c0_i32, %c0_i32_0, %c0_i32_1, %c0_i32_2 : i32, i32, i32, i32
  }
  func.func @transform_5(%arg0: i32) -> (i32, i32, i32, i32) {
    %c0_i32 = arith.constant 0 : i32
    %c0_i32_0 = arith.constant 0 : i32
    %c0_i32_1 = arith.constant 0 : i32
    %c0_i32_2 = arith.constant 0 : i32
    %c0_i32_3 = arith.constant 0 : i32
    return %c0_i32, %c0_i32_0, %c0_i32_1, %c0_i32_2 : i32, i32, i32, i32
  }
  func.func @transform_6(%arg0: i32) -> (i32, i32) {
    %c0_i32 = arith.constant 0 : i32
    %c0_i32_0 = arith.constant 0 : i32
    %c0_i32_1 = arith.constant 0 : i32
    return %c0_i32, %c0_i32_0 : i32, i32
  }
  func.func @transform_7(%arg0: i32) -> (i32, i32) {
    %c0_i32 = arith.constant 0 : i32
    %c0_i32_0 = arith.constant 0 : i32
    %c0_i32_1 = arith.constant 0 : i32
    return %c0_i32, %c0_i32_0 : i32, i32
  }
  func.func @transform_8(%arg0: i32) -> (i32, i32, i32) {
    %c0_i32 = arith.constant 0 : i32
    %c0_i32_0 = arith.constant 0 : i32
    %c0_i32_1 = arith.constant 0 : i32
    return %arg0, %c0_i32, %c0_i32_0 : i32, i32, i32
  }
}

</mosaic_0001>

<llo_original>
// kernel: _lambda_.1
$region0: #{_lambda_.1}
  #allocation0 [shape = 'u32[]', space=smem, size = 0x4, offset = 0x4, fixed_abs, tag = 'smem constant byte address 0x4 - core index']
  #allocation1 [shape = 'u32[144,128]{1,0:T(1,128)}', space=vmem, size = 0x12000, scoped, tag = 'internal scratch']
  %s0 = inlined_call_operand.vmem [shape: f32[2,16,128], index: 0, kind: input, shape index: {}]
  %s1 = inlined_call_operand.vmem [shape: f32[2,8,128], index: 1, kind: input, shape index: {}]
  %s2 = inlined_call_operand.hbm [shape: bf16[1,2,256,128], index: 2, kind: input, shape index: {}]
  %s3 = inlined_call_operand.vmem [shape: f32[1,2,1,128], index: 3, kind: input, shape index: {}]
  %s4 = inlined_call_operand.vmem [shape: bf16[2,2,256,128], index: 4, kind: input, shape index: {}]
  %s5 = inlined_call_operand.vmem [shape: f32[2,2,1,128], index: 5, kind: input, shape index: {}]
  %s6 = inlined_call_operand.hbm [shape: f32[384,128], index: 6, kind: input, shape index: {}]
  %s7 = inlined_call_operand.vmem [shape: f32[1,128], index: 7, kind: input, shape index: {}]
  %s8 = inlined_call_operand.hbm [shape: f32[2,1,128], index: 8, kind: output, shape index: {}]
  %s9 = sld [smem:[#allocation0]]
  $region73: #{_lambda_.1} parent=0
    _
  %s11 = ssub.s32 1, %s9
  %s12 = scalar_select 0, %s11, %s9
  $region1: #{_lambda_.1} parent=0
    #allocation2 [shape = 'u8[131072]{0}', space=vmem, size = 0x20000, scoped, tag = 'input window, operand 2, single buffered']
    #allocation3 [shape = 's32[2]{0}', space=sflag, size = 0x8, scoped, tag = 'scoped memory for _lambda_.1']
    #allocation4 [shape = 's32[2]{0}', space=sflag, size = 0x8, scoped, tag = 'scoped memory for _lambda_.1']
    #allocation5 [shape = 'u8[196608]{0}', space=vmem, size = 0x30000, scoped, tag = 'input window, operand 6, single buffered']
    #allocation6 [shape = 's32[1]{0}', space=sflag, size = 0x4, scoped, tag = 'scoped memory for _lambda_.1']
    #allocation7 [shape = 'u8[1024]{0}', space=vmem, size = 0x400, scoped, tag = 'output window, operand 0']
    %13 = vsyncpa [#allocation3], 0
    %14 = vsyncpa [#allocation6], 0
    %15 = vsyncpa [#allocation4], 0
    %s16 = scalar_lea.sflag [#allocation4], 1
    %17 = vsyncpa %s16, 0
    loop: start=0, step=1, limit=4
    $region2: #{_lambda_.1} parent=1 // loop_pre_header
      _
    $region3: #{_lambda_.1} parent=1 // loop_header
      %s19 = sphi 0, %s23
      %p20 = scmp.ge.s32.totalorder %s19, 4
      %s29 = sphi 0, %s31
      %s32 = sphi 0, %s29
      %s33 = sphi 0, %s32
      %s49 = sphi 0, %s33
      %s55 = sphi 0, %s57
      %s58 = sphi 0, %s55
      %s59 = sphi 0, %s58
      %s75 = sphi 0, %s59
      %s79 = sphi 0, %s79
      %s81 = sphi 0, %s79
      %s82 = sphi 0, %s81
      %s96 = sphi 0, %s82
      %s100 = sphi 0, %s100
      %s102 = sphi 0, %s100
      %s103 = sphi 0, %s102
      %s117 = sphi 0, %s103
      %s121 = sphi 0, %s121
      %s123 = sphi 0, %s121
      %s124 = sphi 0, %s123
      %s138 = sphi 0, %s124
      %s142 = sphi 0, %s142
      %s144 = sphi 0, %s142
      %s145 = sphi 0, %s144
      %s159 = sphi 0, %s145
      %s163 = sphi 0, %s163
      %s165 = sphi 0, %s163
      %s166 = sphi 0, %s165
      %s180 = sphi 0, %s166
      %s184 = sphi 0, %s184
      %s186 = sphi 0, %s184
      %s187 = sphi 0, %s186
      %s201 = sphi 0, %s187
      %s207 = sphi 0, %s209
      %s210 = sphi 0, %s207
      %s211 = sphi 0, %s210
      %s227 = sphi 0, %s211
    $region4: #{_lambda_.1} parent=1 // loop_header_branch
      %22 = sbr.rel (%p20) target = $region8
    $region5: #{_lambda_.1} parent=1 // loop_body
      %s24 = ssub.s32 %s19, 1
      %s25 = ssub.s32 %s19, 2
      %s26 = sadd.s32 %s19, 1
      %s27 = ssub.s32 %s19, %s26
      %p28 = scmp.eq.s32.totalorder %s27, 0
      %s30 = sadd.s32 %s29, 1
      %s31 = scalar_select %p28, %s29, %s30
      %p34 = pneg %p28
      %p35 = scmp.eq.s32.totalorder %s19, 1
      %p36 = por %p34, %p35
      %p37 = scmp.ne.s32.totalorder %s29, %s32
      %p38 = scmp.eq.s32.totalorder %s19, 0
      %p39 = por %p37, %p38
      %p40 = scmp.ne.s32.totalorder %s29, %s32
      %p41 = scmp.eq.s32.totalorder %s24, 1
      %p42 = por %p40, %p41
      %p43 = scmp.ne.s32.totalorder %s32, %s33
      %p44 = scmp.eq.s32.totalorder %s24, 0
      %p45 = por %p43, %p44
      %p46 = scmp.ne.s32.totalorder %s32, %s33
      %p47 = scmp.eq.s32.totalorder %s25, 1
      %p48 = por %p46, %p47
      %p50 = scmp.ne.s32.totalorder %s33, %s49
      %p51 = scmp.eq.s32.totalorder %s25, 0
      %p52 = por %p50, %p51
      %s53 = ssub.s32 %s19, %s26
      %p54 = scmp.eq.s32.totalorder %s53, 0
      %s56 = sadd.s32 %s55, 1
      %s57 = scalar_select %p54, %s55, %s56
      %p60 = pneg %p54
      %p61 = scmp.eq.s32.totalorder %s19, 1
      %p62 = por %p60, %p61
      %p63 = scmp.ne.s32.totalorder %s55, %s58
      %p64 = scmp.eq.s32.totalorder %s19, 0
      %p65 = por %p63, %p64
      %p66 = scmp.ne.s32.totalorder %s55, %s58
      %p67 = scmp.eq.s32.totalorder %s24, 1
      %p68 = por %p66, %p67
      %p69 = scmp.ne.s32.totalorder %s58, %s59
      %p70 = scmp.eq.s32.totalorder %s24, 0
      %p71 = por %p69, %p70
      %p72 = scmp.ne.s32.totalorder %s58, %s59
      %p73 = scmp.eq.s32.totalorder %s25, 1
      %p74 = por %p72, %p73
      %p76 = scmp.ne.s32.totalorder %s59, %s75
      %p77 = scmp.eq.s32.totalorder %s25, 0
      %p78 = por %p76, %p77
      %s80 = sadd.s32 %s79, 1
      %p83 = scmp.eq.s32.totalorder %s19, 1
      %p84 = scmp.ne.s32.totalorder %s79, %s81
      %p85 = scmp.eq.s32.totalorder %s19, 0
      %p86 = por %p84, %p85
      %p87 = scmp.ne.s32.totalorder %s79, %s81
      %p88 = scmp.eq.s32.totalorder %s24, 1
      %p89 = por %p87, %p88
      %p90 = scmp.ne.s32.totalorder %s81, %s82
      %p91 = scmp.eq.s32.totalorder %s24, 0
      %p92 = por %p90, %p91
      %p93 = scmp.ne.s32.totalorder %s81, %s82
      %p94 = scmp.eq.s32.totalorder %s25, 1
      %p95 = por %p93, %p94
      %p97 = scmp.ne.s32.totalorder %s82, %s96
      %p98 = scmp.eq.s32.totalorder %s25, 0
      %p99 = por %p97, %p98
      %s101 = sadd.s32 %s100, 1
      %p104 = scmp.eq.s32.totalorder %s19, 1
      %p105 = scmp.ne.s32.totalorder %s100, %s102
      %p106 = scmp.eq.s32.totalorder %s19, 0
      %p107 = por %p105, %p106
      %p108 = scmp.ne.s32.totalorder %s100, %s102
      %p109 = scmp.eq.s32.totalorder %s24, 1
      %p110 = por %p108, %p109
      %p111 = scmp.ne.s32.totalorder %s102, %s103
      %p112 = scmp.eq.s32.totalorder %s24, 0
      %p113 = por %p111, %p112
      %p114 = scmp.ne.s32.totalorder %s102, %s103
      %p115 = scmp.eq.s32.totalorder %s25, 1
      %p116 = por %p114, %p115
      %p118 = scmp.ne.s32.totalorder %s103, %s117
      %p119 = scmp.eq.s32.totalorder %s25, 0
      %p120 = por %p118, %p119
      %s122 = sadd.s32 %s121, 1
      %p125 = scmp.eq.s32.totalorder %s19, 1
      %p126 = scmp.ne.s32.totalorder %s121, %s123
      %p127 = scmp.eq.s32.totalorder %s19, 0
      %p128 = por %p126, %p127
      %p129 = scmp.ne.s32.totalorder %s121, %s123
      %p130 = scmp.eq.s32.totalorder %s24, 1
      %p131 = por %p129, %p130
      %p132 = scmp.ne.s32.totalorder %s123, %s124
      %p133 = scmp.eq.s32.totalorder %s24, 0
      %p134 = por %p132, %p133
      %p135 = scmp.ne.s32.totalorder %s123, %s124
      %p136 = scmp.eq.s32.totalorder %s25, 1
      %p137 = por %p135, %p136
      %p139 = scmp.ne.s32.totalorder %s124, %s138
      %p140 = scmp.eq.s32.totalorder %s25, 0
      %p141 = por %p139, %p140
      %s143 = sadd.s32 %s142, 1
      %p146 = scmp.eq.s32.totalorder %s19, 1
      %p147 = scmp.ne.s32.totalorder %s142, %s144
      %p148 = scmp.eq.s32.totalorder %s19, 0
      %p149 = por %p147, %p148
      %p150 = scmp.ne.s32.totalorder %s142, %s144
      %p151 = scmp.eq.s32.totalorder %s24, 1
      %p152 = por %p150, %p151
      %p153 = scmp.ne.s32.totalorder %s144, %s145
      %p154 = scmp.eq.s32.totalorder %s24, 0
      %p155 = por %p153, %p154
      %p156 = scmp.ne.s32.totalorder %s144, %s145
      %p157 = scmp.eq.s32.totalorder %s25, 1
      %p158 = por %p156, %p157
      %p160 = scmp.ne.s32.totalorder %s145, %s159
      %p161 = scmp.eq.s32.totalorder %s25, 0
      %p162 = por %p160, %p161
      %s164 = sadd.s32 %s163, 1
      %p167 = scmp.eq.s32.totalorder %s19, 1
      %p168 = scmp.ne.s32.totalorder %s163, %s165
      %p169 = scmp.eq.s32.totalorder %s19, 0
      %p170 = por %p168, %p169
      %p171 = scmp.ne.s32.totalorder %s163, %s165
      %p172 = scmp.eq.s32.totalorder %s24, 1
      %p173 = por %p171, %p172
      %p174 = scmp.ne.s32.totalorder %s165, %s166
      %p175 = scmp.eq.s32.totalorder %s24, 0
      %p176 = por %p174, %p175
      %p177 = scmp.ne.s32.totalorder %s165, %s166
      %p178 = scmp.eq.s32.totalorder %s25, 1
      %p179 = por %p177, %p178
      %p181 = scmp.ne.s32.totalorder %s166, %s180
      %p182 = scmp.eq.s32.totalorder %s25, 0
      %p183 = por %p181, %p182
      %s185 = sadd.s32 %s184, 1
      %p188 = scmp.eq.s32.totalorder %s19, 1
      %p189 = scmp.ne.s32.totalorder %s184, %s186
      %p190 = scmp.eq.s32.totalorder %s19, 0
      %p191 = por %p189, %p190
      %p192 = scmp.ne.s32.totalorder %s184, %s186
      %p193 = scmp.eq.s32.totalorder %s24, 1
      %p194 = por %p192, %p193
      %p195 = scmp.ne.s32.totalorder %s186, %s187
      %p196 = scmp.eq.s32.totalorder %s24, 0
      %p197 = por %p195, %p196
      %p198 = scmp.ne.s32.totalorder %s186, %s187
      %p199 = scmp.eq.s32.totalorder %s25, 1
      %p200 = por %p198, %p199
      %p202 = scmp.ne.s32.totalorder %s187, %s201
      %p203 = scmp.eq.s32.totalorder %s25, 0
      %p204 = por %p202, %p203
      %s205 = ssub.s32 %s19, %s26
      %p206 = scmp.eq.s32.totalorder %s205, 0
      %s208 = sadd.s32 %s207, 1
      %s209 = scalar_select %p206, %s207, %s208
      %p212 = pneg %p206
      %p213 = scmp.eq.s32.totalorder %s19, 1
      %p214 = por %p212, %p213
      %p215 = scmp.ne.s32.totalorder %s207, %s210
      %p216 = scmp.eq.s32.totalorder %s19, 0
      %p217 = por %p215, %p216
      %p218 = scmp.ne.s32.totalorder %s207, %s210
      %p219 = scmp.eq.s32.totalorder %s24, 1
      %p220 = por %p218, %p219
      %p221 = scmp.ne.s32.totalorder %s210, %s211
      %p222 = scmp.eq.s32.totalorder %s24, 0
      %p223 = por %p221, %p222
      %p224 = scmp.ne.s32.totalorder %s210, %s211
      %p225 = scmp.eq.s32.totalorder %s25, 1
      %p226 = por %p224, %p225
      %p228 = scmp.ne.s32.totalorder %s211, %s227
      %p229 = scmp.eq.s32.totalorder %s25, 0
      %p230 = por %p228, %p229
      %p231 = scmp.le.s32.totalorder 1, %s19
      %p232 = scmp.lt.s32.totalorder %s19, 3
      %p233 = pnand %p231, %p232
      %p234 = pneg %p233
      // Predicated region
      $region9: #{_lambda_.1} parent=5 // pred_check
        _
      $region10: #{_lambda_.1} parent=5 // pred_check_branch
        %236 = sbr.rel (%p233) target = $region12
      $region11: #{_lambda_.1} parent=5 // pred_region
        %s237 = ssub.s32 %s19, 1
        // Predicated region
        $region13: #{_lambda_.1} parent=11 // pred_check
          %p238 = pneg %p92
        $region14: #{_lambda_.1} parent=11 // pred_check_branch
          %240 = sbr.rel (%p238) target = $region16
        $region15: #{_lambda_.1} parent=11 // pred_region
          %s242 = ssub.s32 4096, 4096
          %243 = vsyncadd [#allocation3], %s242
          %s244 = sshll.u32 [#allocation2], 4
          %s245 = int_to_ptr.vmem [resolvable:$true] %s244
          %250 = dma.hbm_to_vmem [thread:$0]  %s2, 4096, %s245, [#allocation3], 64, 64, 4
        $region16: #{_lambda_.1} parent=11 // pred_fallthru
          _
        // Predicated region
        $region17: #{_lambda_.1} parent=11 // pred_check
          %p251 = pneg %p113
        $region18: #{_lambda_.1} parent=11 // pred_check_branch
          %253 = sbr.rel (%p251) target = $region20
        $region19: #{_lambda_.1} parent=11 // pred_region
          _
        $region20: #{_lambda_.1} parent=11 // pred_fallthru
          _
        // Predicated region
        $region21: #{_lambda_.1} parent=11 // pred_check
          %p254 = pneg %p134
        $region22: #{_lambda_.1} parent=11 // pred_check_branch
          %256 = sbr.rel (%p254) target = $region24
        $region23: #{_lambda_.1} parent=11 // pred_region
          _
        $region24: #{_lambda_.1} parent=11 // pred_fallthru
          _
        // Predicated region
        $region25: #{_lambda_.1} parent=11 // pred_check
          %p257 = pneg %p155
        $region26: #{_lambda_.1} parent=11 // pred_check_branch
          %259 = sbr.rel (%p257) target = $region28
        $region27: #{_lambda_.1} parent=11 // pred_region
          _
        $region28: #{_lambda_.1} parent=11 // pred_fallthru
          _
        // Predicated region
        $region29: #{_lambda_.1} parent=11 // pred_check
          %p260 = pneg %p176
        $region30: #{_lambda_.1} parent=11 // pred_check_branch
          %262 = sbr.rel (%p260) target = $region32
        $region31: #{_lambda_.1} parent=11 // pred_region
          %s264 = ssub.s32 6144, 6144
          %265 = vsyncadd [#allocation6], %s264
          %s266 = sshll.u32 [#allocation5], 4
          %s267 = int_to_ptr.vmem [resolvable:$true] %s266
          %272 = dma.hbm_to_vmem [thread:$0]  %s6, 6144, %s267, [#allocation6], 128, 128, 8
        $region32: #{_lambda_.1} parent=11 // pred_fallthru
          _
        // Predicated region
        $region33: #{_lambda_.1} parent=11 // pred_check
          %p273 = pneg %p197
        $region34: #{_lambda_.1} parent=11 // pred_check_branch
          %275 = sbr.rel (%p273) target = $region36
        $region35: #{_lambda_.1} parent=11 // pred_region
          _
        $region36: #{_lambda_.1} parent=11 // pred_fallthru
          _
      $region12: #{_lambda_.1} parent=5 // pred_fallthru
        _
      %p276 = scmp.lt.s32.totalorder %s19, 2
      // Predicated region
      $region37: #{_lambda_.1} parent=5 // pred_check
        %p277 = pneg %p276
      $region38: #{_lambda_.1} parent=5 // pred_check_branch
        %279 = sbr.rel (%p277) target = $region40
      $region39: #{_lambda_.1} parent=5 // pred_region
        // Predicated region
        $region41: #{_lambda_.1} parent=39 // pred_check
          %p280 = pneg %p39
        $region42: #{_lambda_.1} parent=39 // pred_check_branch
          %282 = sbr.rel (%p280) target = $region44
        $region43: #{_lambda_.1} parent=39 // pred_region
          %p283 = scmp.lt.s32.totalorder %s19, 1
          %s284 = scalar_select %p283, %s19, 1
          %s285 = smul.addr %s284, 2
          %s286 = smul.addr %s285, 8
          %s287 = scalar_lea.vmem %s0, %s286
        $region44: #{_lambda_.1} parent=39 // pred_fallthru
          _
        // Predicated region
        $region45: #{_lambda_.1} parent=39 // pred_check
          %p288 = pneg %p65
        $region46: #{_lambda_.1} parent=39 // pred_check_branch
          %290 = sbr.rel (%p288) target = $region48
        $region47: #{_lambda_.1} parent=39 // pred_region
          %p291 = scmp.lt.s32.totalorder %s19, 1
          %s292 = scalar_select %p291, %s19, 1
          %s293 = smul.addr %s292, 8
          %s294 = scalar_lea.vmem %s1, %s293
        $region48: #{_lambda_.1} parent=39 // pred_fallthru
          _
      $region40: #{_lambda_.1} parent=5 // pred_fallthru
        _
      %p295 = scmp.le.s32.totalorder 1, %s19
      %p296 = scmp.lt.s32.totalorder %s19, 3
      %p297 = pnand %p295, %p296
      %p298 = pneg %p297
      // Predicated region
      $region49: #{_lambda_.1} parent=5 // pred_check
        _
      $region50: #{_lambda_.1} parent=5 // pred_check_branch
        %300 = sbr.rel (%p297) target = $region52
      $region51: #{_lambda_.1} parent=5 // pred_region
        %s301 = ssub.s32 %s19, 1
        // Predicated region
        $region53: #{_lambda_.1} parent=51 // pred_check
          %p302 = pneg %p92
        $region54: #{_lambda_.1} parent=51 // pred_check_branch
          %304 = sbr.rel (%p302) target = $region56
        $region55: #{_lambda_.1} parent=51 // pred_region
          %305 = dma.done [#allocation3], 4096
        $region56: #{_lambda_.1} parent=51 // pred_fallthru
          _
        // Predicated region
        $region57: #{_lambda_.1} parent=51 // pred_check
          %p306 = pneg %p176
        $region58: #{_lambda_.1} parent=51 // pred_check_branch
          %308 = sbr.rel (%p306) target = $region60
        $region59: #{_lambda_.1} parent=51 // pred_region
          %309 = dma.done [#allocation6], 6144
        $region60: #{_lambda_.1} parent=51 // pred_fallthru
          _
        %p310 = scmp.lt.s32.totalorder %s24, 1
        %s311 = scalar_select %p310, %s24, 1
        %s312 = smul.addr %s311, 2
        %s313 = smul.addr %s312, 8
        %s314 = scalar_lea.vmem %s0, %s313
        %p315 = pneg %p45
        %p316 = pneg %p42
        %p317 = scmp.lt.s32.totalorder %s24, 1
        %s318 = scalar_select %p317, %s24, 1
        %s319 = smul.addr %s318, 8
        %s320 = scalar_lea.vmem %s1, %s319
        %p321 = pneg %p71
        %p322 = pneg %p68
        %p323 = pneg %p92
        %p324 = pneg %p89
        %p325 = pneg %p113
        %p326 = pneg %p110
        %p327 = pneg %p134
        %p328 = pneg %p131
        %p329 = pneg %p155
        %p330 = pneg %p152
        %p331 = pneg %p176
        %p332 = pneg %p173
        %p333 = pneg %p197
        %p334 = pneg %p194
        %p335 = pneg %p223
        %p336 = pneg %p220
        %s337 = sand.u32 %s210, 1
        %s338 = scalar_lea.sflag [#allocation4], %s337
        %s339 = sand.u32 %s210, 1
        %s340 = scalar_lea.vmem [#allocation7], %s339
        %p341 = scmp.lt.s32.totalorder %s24, 1
        %s342 = scalar_select %p341, %s24, 1
        %s343 = smul.addr %s342, 2
        %s344 = smul.addr %s343, 8
        %s345 = scalar_lea.vmem %s0, %s344
        %p346 = scmp.lt.s32.totalorder %s24, 1
        %s347 = scalar_select %p346, %s24, 1
        %s348 = smul.addr %s347, 8
        %s349 = scalar_lea.vmem %s1, %s348
        %v351 = vld [vmem:[%s345] sm:$0xff]
        %v352 = vld [vmem:[%s345 + $0x8] sm:$0xff]
        %v353 = vlaneseq
        %v354 = vshrl.u32 %v353, 7
        %v355 = vadd.s32 %v354, 8
        %vm356 = vcmp.lt.s32.totalorder %v354, 0
        %v357 = vsub.s32 0, %v354
        %v358 = vsel %vm356, %v357, %v354
        %v359 = vshrl.u32 %v358, 3
        %v360 = vand.u32 %v358, 7
        %v361 = vsub.s32 0, %v360
        %v362 = vsel %vm356, %v361, %v360
        %vm363 = vcmp.lt.s32.totalorder %v355, 0
        %v364 = vsub.s32 0, %v355
        %v365 = vsel %vm363, %v364, %v355
        %v366 = vshrl.u32 %v365, 3
        %v367 = vand.u32 %v365, 7
        %v368 = vsub.s32 0, %v367
        %v369 = vsel %vm363, %v368, %v367
        %vm370 = vcmp.ne.s32.totalorder %v362, 0
        %vm371 = vcmp.ne.s32.totalorder %v369, 0
        %vm372 = vcmp.lt.s32.totalorder %v362, 0
        %vm373 = vcmp.lt.s32.totalorder %v369, 0
        %vm374 = vmand %vm372, %vm370
        %vm375 = vmand %vm373, %vm371
        %v376 = vadd.s32 %v362, 8
        %v377 = vadd.s32 %v369, 8
        %v378 = vsel %vm374, %v376, %v362
        %v379 = vsel %vm375, %v377, %v369
        %vm382 = vcmask 1040384
        %v383 = vrot.slane %v351, 7
        %v384 = vrot.slane %v352, 7
        %v385 = vsel %vm382, %v383, %v384
        %v388 = vsel %vm382, 0.0, %v383
        %vm389 = vcmp.ge.s32.totalorder %v378, 1
        %vm390 = vcmp.ge.s32.totalorder %v379, 1
        %v391 = vsel %vm389, %v388, 0.0
        %v392 = vsel %vm390, %v385, 0.0
        %v393 = vpack.c.bf16 %v392, %v391
        %v394 = vpack.c.bf16 %v352, %v351
        %v395 = vld [vmem:[#allocation2] sm:$0xf]
        %v396 = vld [vmem:[#allocation2 + $0x4] sm:$0xf]
        %v397 = vld [vmem:[#allocation2 + $0x8] sm:$0xf]
        %v398 = vld [vmem:[#allocation2 + $0xc] sm:$0xf]
        %v399 = vld [vmem:[#allocation2 + $0x10] sm:$0xf]
        %v400 = vld [vmem:[#allocation2 + $0x14] sm:$0xf]
        %v401 = vld [vmem:[#allocation2 + $0x18] sm:$0xf]
        %v402 = vld [vmem:[#allocation2 + $0x1c] sm:$0xf]
        %v403 = vld [vmem:[#allocation2 + $0x20] sm:$0xf]
        %v404 = vld [vmem:[#allocation2 + $0x24] sm:$0xf]
        %v405 = vld [vmem:[#allocation2 + $0x28] sm:$0xf]
        %v406 = vld [vmem:[#allocation2 + $0x2c] sm:$0xf]
        %v407 = vld [vmem:[#allocation2 + $0x30] sm:$0xf]
        %v408 = vld [vmem:[#allocation2 + $0x34] sm:$0xf]
        %v409 = vld [vmem:[#allocation2 + $0x38] sm:$0xf]
        %v410 = vld [vmem:[#allocation2 + $0x3c] sm:$0xf]
        %v411 = vld [vmem:[#allocation2 + $0x40] sm:$0xf]
        %v412 = vld [vmem:[#allocation2 + $0x44] sm:$0xf]
        %v413 = vld [vmem:[#allocation2 + $0x48] sm:$0xf]
        %v414 = vld [vmem:[#allocation2 + $0x4c] sm:$0xf]
        %v415 = vld [vmem:[#allocation2 + $0x50] sm:$0xf]
        %v416 = vld [vmem:[#allocation2 + $0x54] sm:$0xf]
        %v417 = vld [vmem:[#allocation2 + $0x58] sm:$0xf]
        %v418 = vld [vmem:[#allocation2 + $0x5c] sm:$0xf]
        %v419 = vld [vmem:[#allocation2 + $0x60] sm:$0xf]
        %v420 = vld [vmem:[#allocation2 + $0x64] sm:$0xf]
        %v421 = vld [vmem:[#allocation2 + $0x68] sm:$0xf]
        %v422 = vld [vmem:[#allocation2 + $0x6c] sm:$0xf]
        %v423 = vld [vmem:[#allocation2 + $0x70] sm:$0xf]
        %v424 = vld [vmem:[#allocation2 + $0x74] sm:$0xf]
        %v425 = vld [vmem:[#allocation2 + $0x78] sm:$0xf]
        %v426 = vld [vmem:[#allocation2 + $0x7c] sm:$0xf]
        %v427 = vld [vmem:[%s3] sm:$0x1]
        %v429 = vlaneseq
        %v430 = vshrl.u32 %v429, 7
        %v431 = vsub.s32 0, %v430
        %v432 = vrot.slane %v427, %v431
        %v466 = vunpack.c.l.b16 %v395
        %v467 = vunpack.c.l.b16 %v396
        %v468 = vunpack.c.l.b16 %v397
        %v469 = vunpack.c.l.b16 %v398
        %v470 = vunpack.c.l.b16 %v399
        %v471 = vunpack.c.l.b16 %v400
        %v472 = vunpack.c.l.b16 %v401
        %v473 = vunpack.c.l.b16 %v402
        %v474 = vunpack.c.l.b16 %v403
        %v475 = vunpack.c.l.b16 %v404
        %v476 = vunpack.c.l.b16 %v405
        %v477 = vunpack.c.l.b16 %v406
        %v478 = vunpack.c.l.b16 %v407
        %v479 = vunpack.c.l.b16 %v408
        %v480 = vunpack.c.l.b16 %v409
        %v481 = vunpack.c.l.b16 %v410
        %v482 = vunpack.c.l.b16 %v411
        %v483 = vunpack.c.l.b16 %v412
        %v484 = vunpack.c.l.b16 %v413
        %v485 = vunpack.c.l.b16 %v414
        %v486 = vunpack.c.l.b16 %v415
        %v487 = vunpack.c.l.b16 %v416
        %v488 = vunpack.c.l.b16 %v417
        %v489 = vunpack.c.l.b16 %v418
        %v490 = vunpack.c.l.b16 %v419
        %v491 = vunpack.c.l.b16 %v420
        %v492 = vunpack.c.l.b16 %v421
        %v493 = vunpack.c.l.b16 %v422
        %v494 = vunpack.c.l.b16 %v423
        %v495 = vunpack.c.l.b16 %v424
        %v496 = vunpack.c.l.b16 %v425
        %v497 = vunpack.c.l.b16 %v426
        %v498 = vpack.c.b16 %v467, %v466
        %v499 = vpack.c.b16 %v469, %v468
        %v500 = vpack.c.b16 %v471, %v470
        %v501 = vpack.c.b16 %v473, %v472
        %v502 = vpack.c.b16 %v475, %v474
        %v503 = vpack.c.b16 %v477, %v476
        %v504 = vpack.c.b16 %v479, %v478
        %v505 = vpack.c.b16 %v481, %v480
        %v506 = vpack.c.b16 %v483, %v482
        %v507 = vpack.c.b16 %v485, %v484
        %v508 = vpack.c.b16 %v487, %v486
        %v509 = vpack.c.b16 %v489, %v488
        %v510 = vpack.c.b16 %v491, %v490
        %v511 = vpack.c.b16 %v493, %v492
        %v512 = vpack.c.b16 %v495, %v494
        %v513 = vpack.c.b16 %v497, %v496
        %530 = vmatprep.subr.bf16.mxu0 0
        %531 = vmatpush1.bf16.msra.mxu0 %v505
        %532 = vmatprep.subr.bf16.mxu0 0
        %533 = vmatpush1.bf16.msra.mxu0 %v504
        %534 = vmatprep.subr.bf16.mxu0 0
        %535 = vmatpush1.bf16.msra.mxu0 %v503
        %536 = vmatprep.subr.bf16.mxu0 0
        %537 = vmatpush1.bf16.msra.mxu0 %v502
        %538 = vmatprep.subr.bf16.mxu0 0
        %539 = vmatpush1.bf16.msra.mxu0 %v501
        %540 = vmatprep.subr.bf16.mxu0 0
        %541 = vmatpush1.bf16.msra.mxu0 %v500
        %542 = vmatprep.subr.bf16.mxu0 0
        %543 = vmatpush1.bf16.msra.mxu0 %v499
        %544 = vmatprep.subr.bf16.mxu0 0
        %545 = vmatpush1.bf16.msra.mxu0 %v498
        %546 = vmatprep.subr.bf16.mxu0 0
        %547 = vmatpush2.bf16.msra.mxu0 %v513
        %548 = vmatprep.subr.bf16.mxu0 0
        %549 = vmatpush2.bf16.msra.mxu0 %v512
        %550 = vmatprep.subr.bf16.mxu0 0
        %551 = vmatpush2.bf16.msra.mxu0 %v511
        %552 = vmatprep.subr.bf16.mxu0 0
        %553 = vmatpush2.bf16.msra.mxu0 %v510
        %554 = vmatprep.subr.bf16.mxu0 0
        %555 = vmatpush2.bf16.msra.mxu0 %v509
        %556 = vmatprep.subr.bf16.mxu0 0
        %557 = vmatpush2.bf16.msra.mxu0 %v508
        %558 = vmatprep.subr.bf16.mxu0 0
        %559 = vmatpush2.bf16.msra.mxu0 %v507
        %560 = vmatprep.subr.bf16.mxu0 0
        %561 = vmatpush2.bf16.msra.mxu0 %v506
        %562 = vmatprep.mubr.bf16.mxu0 %v394
        %563 = vmatmul.mubr.bf16.gmra.mxu0 %v393
        %v564 = vpop.f32.mrf.mxu0
        %v565 = vadd.f32 %v432, %v564
        %v566 = vpop.f32.mrf.mxu0
        %v567 = vpop.f32.mrf.mxu0
        %v568 = vadd.f32 %v432, %v567
        %v569 = vpop.f32.mrf.mxu0
        %570 = vdwg.mxu0
        %v571 = vmax.f32 %v565, 0.0
        %v572 = vmax.f32 %v568, 0.0
        %v575 = vrot.slane %v571, 7
        %v576 = vrot.slane %v572, 7
        %v577 = vsel %vm382, %v575, %v576
        %v580 = vsel %vm382, 0.0, %v575
        %v581 = vsel %vm389, %v580, 0.0
        %v582 = vsel %vm390, %v577, 0.0
        %v583 = vpack.c.bf16 %v582, %v581
        %v584 = vpack.c.bf16 %v572, %v571
        %s585 = scalar_lea.vmem [#allocation2], 128
        %v586 = vld [vmem:[%s585] sm:$0xf]
        %v587 = vld [vmem:[%s585 + $0x4] sm:$0xf]
        %v588 = vld [vmem:[%s585 + $0x8] sm:$0xf]
        %v589 = vld [vmem:[%s585 + $0xc] sm:$0xf]
        %v590 = vld [vmem:[%s585 + $0x10] sm:$0xf]
        %v591 = vld [vmem:[%s585 + $0x14] sm:$0xf]
        %v592 = vld [vmem:[%s585 + $0x18] sm:$0xf]
        %v593 = vld [vmem:[%s585 + $0x1c] sm:$0xf]
        %v594 = vld [vmem:[%s585 + $0x20] sm:$0xf]
        %v595 = vld [vmem:[%s585 + $0x24] sm:$0xf]
        %v596 = vld [vmem:[%s585 + $0x28] sm:$0xf]
        %v597 = vld [vmem:[%s585 + $0x2c] sm:$0xf]
        %v598 = vld [vmem:[%s585 + $0x30] sm:$0xf]
        %v599 = vld [vmem:[%s585 + $0x34] sm:$0xf]
        %v600 = vld [vmem:[%s585 + $0x38] sm:$0xf]
        %v601 = vld [vmem:[%s585 + $0x3c] sm:$0xf]
        %v602 = vld [vmem:[%s585 + $0x40] sm:$0xf]
        %v603 = vld [vmem:[%s585 + $0x44] sm:$0xf]
        %v604 = vld [vmem:[%s585 + $0x48] sm:$0xf]
        %v605 = vld [vmem:[%s585 + $0x4c] sm:$0xf]
        %v606 = vld [vmem:[%s585 + $0x50] sm:$0xf]
        %v607 = vld [vmem:[%s585 + $0x54] sm:$0xf]
        %v608 = vld [vmem:[%s585 + $0x58] sm:$0xf]
        %v609 = vld [vmem:[%s585 + $0x5c] sm:$0xf]
        %v610 = vld [vmem:[%s585 + $0x60] sm:$0xf]
        %v611 = vld [vmem:[%s585 + $0x64] sm:$0xf]
        %v612 = vld [vmem:[%s585 + $0x68] sm:$0xf]
        %v613 = vld [vmem:[%s585 + $0x6c] sm:$0xf]
        %v614 = vld [vmem:[%s585 + $0x70] sm:$0xf]
        %v615 = vld [vmem:[%s585 + $0x74] sm:$0xf]
        %v616 = vld [vmem:[%s585 + $0x78] sm:$0xf]
        %v617 = vld [vmem:[%s585 + $0x7c] sm:$0xf]
        %s618 = scalar_lea.vmem %s3, 1
        %v619 = vld [vmem:[%s618] sm:$0x1]
        %v621 = vlaneseq
        %v622 = vshrl.u32 %v621, 7
        %v623 = vsub.s32 0, %v622
        %v624 = vrot.slane %v619, %v623
        %v658 = vunpack.c.l.b16 %v586
        %v659 = vunpack.c.l.b16 %v587
        %v660 = vunpack.c.l.b16 %v588
        %v661 = vunpack.c.l.b16 %v589
        %v662 = vunpack.c.l.b16 %v590
        %v663 = vunpack.c.l.b16 %v591
        %v664 = vunpack.c.l.b16 %v592
        %v665 = vunpack.c.l.b16 %v593
        %v666 = vunpack.c.l.b16 %v594
        %v667 = vunpack.c.l.b16 %v595
        %v668 = vunpack.c.l.b16 %v596
        %v669 = vunpack.c.l.b16 %v597
        %v670 = vunpack.c.l.b16 %v598
        %v671 = vunpack.c.l.b16 %v599
        %v672 = vunpack.c.l.b16 %v600
        %v673 = vunpack.c.l.b16 %v601
        %v674 = vunpack.c.l.b16 %v602
        %v675 = vunpack.c.l.b16 %v603
        %v676 = vunpack.c.l.b16 %v604
        %v677 = vunpack.c.l.b16 %v605
        %v678 = vunpack.c.l.b16 %v606
        %v679 = vunpack.c.l.b16 %v607
        %v680 = vunpack.c.l.b16 %v608
        %v681 = vunpack.c.l.b16 %v609
        %v682 = vunpack.c.l.b16 %v610
        %v683 = vunpack.c.l.b16 %v611
        %v684 = vunpack.c.l.b16 %v612
        %v685 = vunpack.c.l.b16 %v613
        %v686 = vunpack.c.l.b16 %v614
        %v687 = vunpack.c.l.b16 %v615
        %v688 = vunpack.c.l.b16 %v616
        %v689 = vunpack.c.l.b16 %v617
        %v690 = vpack.c.b16 %v659, %v658
        %v691 = vpack.c.b16 %v661, %v660
        %v692 = vpack.c.b16 %v663, %v662
        %v693 = vpack.c.b16 %v665, %v664
        %v694 = vpack.c.b16 %v667, %v666
        %v695 = vpack.c.b16 %v669, %v668
        %v696 = vpack.c.b16 %v671, %v670
        %v697 = vpack.c.b16 %v673, %v672
        %v698 = vpack.c.b16 %v675, %v674
        %v699 = vpack.c.b16 %v677, %v676
        %v700 = vpack.c.b16 %v679, %v678
        %v701 = vpack.c.b16 %v681, %v680
        %v702 = vpack.c.b16 %v683, %v682
        %v703 = vpack.c.b16 %v685, %v684
        %v704 = vpack.c.b16 %v687, %v686
        %v705 = vpack.c.b16 %v689, %v688
        %722 = vmatprep.subr.bf16.mxu0 0
        %723 = vmatpush1.bf16.msra.mxu0 %v697
        %724 = vmatprep.subr.bf16.mxu0 0
        %725 = vmatpush1.bf16.msra.mxu0 %v696
        %726 = vmatprep.subr.bf16.mxu0 0
        %727 = vmatpush1.bf16.msra.mxu0 %v695
        %728 = vmatprep.subr.bf16.mxu0 0
        %729 = vmatpush1.bf16.msra.mxu0 %v694
        %730 = vmatprep.subr.bf16.mxu0 0
        %731 = vmatpush1.bf16.msra.mxu0 %v693
        %732 = vmatprep.subr.bf16.mxu0 0
        %733 = vmatpush1.bf16.msra.mxu0 %v692
        %734 = vmatprep.subr.bf16.mxu0 0
        %735 = vmatpush1.bf16.msra.mxu0 %v691
        %736 = vmatprep.subr.bf16.mxu0 0
        %737 = vmatpush1.bf16.msra.mxu0 %v690
        %738 = vmatprep.subr.bf16.mxu0 0
        %739 = vmatpush2.bf16.msra.mxu0 %v705
        %740 = vmatprep.subr.bf16.mxu0 0
        %741 = vmatpush2.bf16.msra.mxu0 %v704
        %742 = vmatprep.subr.bf16.mxu0 0
        %743 = vmatpush2.bf16.msra.mxu0 %v703
        %744 = vmatprep.subr.bf16.mxu0 0
        %745 = vmatpush2.bf16.msra.mxu0 %v702
        %746 = vmatprep.subr.bf16.mxu0 0
        %747 = vmatpush2.bf16.msra.mxu0 %v701
        %748 = vmatprep.subr.bf16.mxu0 0
        %749 = vmatpush2.bf16.msra.mxu0 %v700
        %750 = vmatprep.subr.bf16.mxu0 0
        %751 = vmatpush2.bf16.msra.mxu0 %v699
        %752 = vmatprep.subr.bf16.mxu0 0
        %753 = vmatpush2.bf16.msra.mxu0 %v698
        %754 = vmatprep.mubr.bf16.mxu0 %v584
        %755 = vmatmul.mubr.bf16.gmra.mxu0 %v583
        %v756 = vpop.f32.mrf.mxu0
        %v757 = vadd.f32 %v624, %v756
        %v758 = vpop.f32.mrf.mxu0
        %v759 = vpop.f32.mrf.mxu0
        %v760 = vadd.f32 %v624, %v759
        %v761 = vpop.f32.mrf.mxu0
        %762 = vdwg.mxu0
        %v763 = vmax.f32 %v757, 0.0
        %v764 = vmax.f32 %v760, 0.0
        %v765 = vadd.f32 %v763, %v351
        %v766 = vadd.f32 %v764, %v352
        %v767 = vmax.f32 %v765, 0.0
        %v768 = vmax.f32 %v766, 0.0
        %v769 = vld [vmem:[%s349] sm:$0xff]
        %v771 = vrot.slane %v769, 7
        %v773 = vsel %vm382, 0.0, %v771
        %v774 = vsel %vm389, %v773, 0.0
        %v775 = vpack.c.bf16 %v774, %v774
        %v776 = vpack.c.bf16 %v769, %v769
        %v777 = vld [vmem:[%s4] sm:$0xf]
        %v778 = vld [vmem:[%s4 + $0x4] sm:$0xf]
        %v779 = vld [vmem:[%s4 + $0x8] sm:$0xf]
        %v780 = vld [vmem:[%s4 + $0xc] sm:$0xf]
        %v781 = vld [vmem:[%s4 + $0x10] sm:$0xf]
        %v782 = vld [vmem:[%s4 + $0x14] sm:$0xf]
        %v783 = vld [vmem:[%s4 + $0x18] sm:$0xf]
        %v784 = vld [vmem:[%s4 + $0x1c] sm:$0xf]
        %v785 = vld [vmem:[%s4 + $0x20] sm:$0xf]
        %v786 = vld [vmem:[%s4 + $0x24] sm:$0xf]
        %v787 = vld [vmem:[%s4 + $0x28] sm:$0xf]
        %v788 = vld [vmem:[%s4 + $0x2c] sm:$0xf]
        %v789 = vld [vmem:[%s4 + $0x30] sm:$0xf]
        %v790 = vld [vmem:[%s4 + $0x34] sm:$0xf]
        %v791 = vld [vmem:[%s4 + $0x38] sm:$0xf]
        %v792 = vld [vmem:[%s4 + $0x3c] sm:$0xf]
        %v793 = vld [vmem:[%s4 + $0x40] sm:$0xf]
        %v794 = vld [vmem:[%s4 + $0x44] sm:$0xf]
        %v795 = vld [vmem:[%s4 + $0x48] sm:$0xf]
        %v796 = vld [vmem:[%s4 + $0x4c] sm:$0xf]
        %v797 = vld [vmem:[%s4 + $0x50] sm:$0xf]
        %v798 = vld [vmem:[%s4 + $0x54] sm:$0xf]
        %v799 = vld [vmem:[%s4 + $0x58] sm:$0xf]
        %v800 = vld [vmem:[%s4 + $0x5c] sm:$0xf]
        %v801 = vld [vmem:[%s4 + $0x60] sm:$0xf]
        %v802 = vld [vmem:[%s4 + $0x64] sm:$0xf]
        %v803 = vld [vmem:[%s4 + $0x68] sm:$0xf]
        %v804 = vld [vmem:[%s4 + $0x6c] sm:$0xf]
        %v805 = vld [vmem:[%s4 + $0x70] sm:$0xf]
        %v806 = vld [vmem:[%s4 + $0x74] sm:$0xf]
        %v807 = vld [vmem:[%s4 + $0x78] sm:$0xf]
        %v808 = vld [vmem:[%s4 + $0x7c] sm:$0xf]
        %v809 = vld [vmem:[%s5] sm:$0x1]
        %v811 = vlaneseq
        %v812 = vshrl.u32 %v811, 7
        %v813 = vsub.s32 0, %v812
        %v814 = vrot.slane %v809, %v813
        %v848 = vunpack.c.l.b16 %v777
        %v849 = vunpack.c.l.b16 %v778
        %v850 = vunpack.c.l.b16 %v779
        %v851 = vunpack.c.l.b16 %v780
        %v852 = vunpack.c.l.b16 %v781
        %v853 = vunpack.c.l.b16 %v782
        %v854 = vunpack.c.l.b16 %v783
        %v855 = vunpack.c.l.b16 %v784
        %v856 = vunpack.c.l.b16 %v785
        %v857 = vunpack.c.l.b16 %v786
        %v858 = vunpack.c.l.b16 %v787
        %v859 = vunpack.c.l.b16 %v788
        %v860 = vunpack.c.l.b16 %v789
        %v861 = vunpack.c.l.b16 %v790
        %v862 = vunpack.c.l.b16 %v791
        %v863 = vunpack.c.l.b16 %v792
        %v864 = vunpack.c.l.b16 %v793
        %v865 = vunpack.c.l.b16 %v794
        %v866 = vunpack.c.l.b16 %v795
        %v867 = vunpack.c.l.b16 %v796
        %v868 = vunpack.c.l.b16 %v797
        %v869 = vunpack.c.l.b16 %v798
        %v870 = vunpack.c.l.b16 %v799
        %v871 = vunpack.c.l.b16 %v800
        %v872 = vunpack.c.l.b16 %v801
        %v873 = vunpack.c.l.b16 %v802
        %v874 = vunpack.c.l.b16 %v803
        %v875 = vunpack.c.l.b16 %v804
        %v876 = vunpack.c.l.b16 %v805
        %v877 = vunpack.c.l.b16 %v806
        %v878 = vunpack.c.l.b16 %v807
        %v879 = vunpack.c.l.b16 %v808
        %v880 = vpack.c.b16 %v849, %v848
        %v881 = vpack.c.b16 %v851, %v850
        %v882 = vpack.c.b16 %v853, %v852
        %v883 = vpack.c.b16 %v855, %v854
        %v884 = vpack.c.b16 %v857, %v856
        %v885 = vpack.c.b16 %v859, %v858
        %v886 = vpack.c.b16 %v861, %v860
        %v887 = vpack.c.b16 %v863, %v862
        %v888 = vpack.c.b16 %v865, %v864
        %v889 = vpack.c.b16 %v867, %v866
        %v890 = vpack.c.b16 %v869, %v868
        %v891 = vpack.c.b16 %v871, %v870
        %v892 = vpack.c.b16 %v873, %v872
        %v893 = vpack.c.b16 %v875, %v874
        %v894 = vpack.c.b16 %v877, %v876
        %v895 = vpack.c.b16 %v879, %v878
        %912 = vmatprep.subr.bf16.mxu0 0
        %913 = vmatpush1.bf16.msra.mxu0 %v887
        %914 = vmatprep.subr.bf16.mxu0 0
        %915 = vmatpush1.bf16.msra.mxu0 %v886
        %916 = vmatprep.subr.bf16.mxu0 0
        %917 = vmatpush1.bf16.msra.mxu0 %v885
        %918 = vmatprep.subr.bf16.mxu0 0
        %919 = vmatpush1.bf16.msra.mxu0 %v884
        %920 = vmatprep.subr.bf16.mxu0 0
        %921 = vmatpush1.bf16.msra.mxu0 %v883
        %922 = vmatprep.subr.bf16.mxu0 0
        %923 = vmatpush1.bf16.msra.mxu0 %v882
        %924 = vmatprep.subr.bf16.mxu0 0
        %925 = vmatpush1.bf16.msra.mxu0 %v881
        %926 = vmatprep.subr.bf16.mxu0 0
        %927 = vmatpush1.bf16.msra.mxu0 %v880
        %928 = vmatprep.subr.bf16.mxu0 0
        %929 = vmatpush2.bf16.msra.mxu0 %v895
        %930 = vmatprep.subr.bf16.mxu0 0
        %931 = vmatpush2.bf16.msra.mxu0 %v894
        %932 = vmatprep.subr.bf16.mxu0 0
        %933 = vmatpush2.bf16.msra.mxu0 %v893
        %934 = vmatprep.subr.bf16.mxu0 0
        %935 = vmatpush2.bf16.msra.mxu0 %v892
        %936 = vmatprep.subr.bf16.mxu0 0
        %937 = vmatpush2.bf16.msra.mxu0 %v891
        %938 = vmatprep.subr.bf16.mxu0 0
        %939 = vmatpush2.bf16.msra.mxu0 %v890
        %940 = vmatprep.subr.bf16.mxu0 0
        %941 = vmatpush2.bf16.msra.mxu0 %v889
        %942 = vmatprep.subr.bf16.mxu0 0
        %943 = vmatpush2.bf16.msra.mxu0 %v888
        %944 = vmatprep.mubr.bf16.mxu0 %v776
        %945 = vmatmul.mubr.bf16.gmra.mxu0 %v775
        %v946 = vpop.f32.mrf.mxu0
        %v947 = vadd.f32 %v814, %v946
        %v948 = vpop.f32.mrf.mxu0
        %v949 = vpop.f32.mrf.mxu0
        %v950 = vpop.f32.mrf.mxu0
        %951 = vdwg.mxu0
        %v952 = vmax.f32 %v947, 0.0
        %v954 = vrot.slane %v952, 7
        %v956 = vsel %vm382, 0.0, %v954
        %v957 = vsel %vm389, %v956, 0.0
        %v958 = vpack.c.bf16 %v957, %v957
        %v959 = vpack.c.bf16 %v952, %v952
        %s960 = scalar_lea.vmem %s4, 128
        %v961 = vld [vmem:[%s960] sm:$0xf]
        %v962 = vld [vmem:[%s960 + $0x4] sm:$0xf]
        %v963 = vld [vmem:[%s960 + $0x8] sm:$0xf]
        %v964 = vld [vmem:[%s960 + $0xc] sm:$0xf]
        %v965 = vld [vmem:[%s960 + $0x10] sm:$0xf]
        %v966 = vld [vmem:[%s960 + $0x14] sm:$0xf]
        %v967 = vld [vmem:[%s960 + $0x18] sm:$0xf]
        %v968 = vld [vmem:[%s960 + $0x1c] sm:$0xf]
        %v969 = vld [vmem:[%s960 + $0x20] sm:$0xf]
        %v970 = vld [vmem:[%s960 + $0x24] sm:$0xf]
        %v971 = vld [vmem:[%s960 + $0x28] sm:$0xf]
        %v972 = vld [vmem:[%s960 + $0x2c] sm:$0xf]
        %v973 = vld [vmem:[%s960 + $0x30] sm:$0xf]
        %v974 = vld [vmem:[%s960 + $0x34] sm:$0xf]
        %v975 = vld [vmem:[%s960 + $0x38] sm:$0xf]
        %v976 = vld [vmem:[%s960 + $0x3c] sm:$0xf]
        %v977 = vld [vmem:[%s960 + $0x40] sm:$0xf]
        %v978 = vld [vmem:[%s960 + $0x44] sm:$0xf]
        %v979 = vld [vmem:[%s960 + $0x48] sm:$0xf]
        %v980 = vld [vmem:[%s960 + $0x4c] sm:$0xf]
        %v981 = vld [vmem:[%s960 + $0x50] sm:$0xf]
        %v982 = vld [vmem:[%s960 + $0x54] sm:$0xf]
        %v983 = vld [vmem:[%s960 + $0x58] sm:$0xf]
        %v984 = vld [vmem:[%s960 + $0x5c] sm:$0xf]
        %v985 = vld [vmem:[%s960 + $0x60] sm:$0xf]
        %v986 = vld [vmem:[%s960 + $0x64] sm:$0xf]
        %v987 = vld [vmem:[%s960 + $0x68] sm:$0xf]
        %v988 = vld [vmem:[%s960 + $0x6c] sm:$0xf]
        %v989 = vld [vmem:[%s960 + $0x70] sm:$0xf]
        %v990 = vld [vmem:[%s960 + $0x74] sm:$0xf]
        %v991 = vld [vmem:[%s960 + $0x78] sm:$0xf]
        %v992 = vld [vmem:[%s960 + $0x7c] sm:$0xf]
        %s993 = scalar_lea.vmem %s5, 1
        %v994 = vld [vmem:[%s993] sm:$0x1]
        %v996 = vlaneseq
        %v997 = vshrl.u32 %v996, 7
        %v998 = vsub.s32 0, %v997
        %v999 = vrot.slane %v994, %v998
        %v1033 = vunpack.c.l.b16 %v961
        %v1034 = vunpack.c.l.b16 %v962
        %v1035 = vunpack.c.l.b16 %v963
        %v1036 = vunpack.c.l.b16 %v964
        %v1037 = vunpack.c.l.b16 %v965
        %v1038 = vunpack.c.l.b16 %v966
        %v1039 = vunpack.c.l.b16 %v967
        %v1040 = vunpack.c.l.b16 %v968
        %v1041 = vunpack.c.l.b16 %v969
        %v1042 = vunpack.c.l.b16 %v970
        %v1043 = vunpack.c.l.b16 %v971
        %v1044 = vunpack.c.l.b16 %v972
        %v1045 = vunpack.c.l.b16 %v973
        %v1046 = vunpack.c.l.b16 %v974
        %v1047 = vunpack.c.l.b16 %v975
        %v1048 = vunpack.c.l.b16 %v976
        %v1049 = vunpack.c.l.b16 %v977
        %v1050 = vunpack.c.l.b16 %v978
        %v1051 = vunpack.c.l.b16 %v979
        %v1052 = vunpack.c.l.b16 %v980
        %v1053 = vunpack.c.l.b16 %v981
        %v1054 = vunpack.c.l.b16 %v982
        %v1055 = vunpack.c.l.b16 %v983
        %v1056 = vunpack.c.l.b16 %v984
        %v1057 = vunpack.c.l.b16 %v985
        %v1058 = vunpack.c.l.b16 %v986
        %v1059 = vunpack.c.l.b16 %v987
        %v1060 = vunpack.c.l.b16 %v988
        %v1061 = vunpack.c.l.b16 %v989
        %v1062 = vunpack.c.l.b16 %v990
        %v1063 = vunpack.c.l.b16 %v991
        %v1064 = vunpack.c.l.b16 %v992
        %v1065 = vpack.c.b16 %v1034, %v1033
        %v1066 = vpack.c.b16 %v1036, %v1035
        %v1067 = vpack.c.b16 %v1038, %v1037
        %v1068 = vpack.c.b16 %v1040, %v1039
        %v1069 = vpack.c.b16 %v1042, %v1041
        %v1070 = vpack.c.b16 %v1044, %v1043
        %v1071 = vpack.c.b16 %v1046, %v1045
        %v1072 = vpack.c.b16 %v1048, %v1047
        %v1073 = vpack.c.b16 %v1050, %v1049
        %v1074 = vpack.c.b16 %v1052, %v1051
        %v1075 = vpack.c.b16 %v1054, %v1053
        %v1076 = vpack.c.b16 %v1056, %v1055
        %v1077 = vpack.c.b16 %v1058, %v1057
        %v1078 = vpack.c.b16 %v1060, %v1059
        %v1079 = vpack.c.b16 %v1062, %v1061
        %v1080 = vpack.c.b16 %v1064, %v1063
        %1097 = vmatprep.subr.bf16.mxu0 0
        %1098 = vmatpush1.bf16.msra.mxu0 %v1072
        %1099 = vmatprep.subr.bf16.mxu0 0
        %1100 = vmatpush1.bf16.msra.mxu0 %v1071
        %1101 = vmatprep.subr.bf16.mxu0 0
        %1102 = vmatpush1.bf16.msra.mxu0 %v1070
        %1103 = vmatprep.subr.bf16.mxu0 0
        %1104 = vmatpush1.bf16.msra.mxu0 %v1069
        %1105 = vmatprep.subr.bf16.mxu0 0
        %1106 = vmatpush1.bf16.msra.mxu0 %v1068
        %1107 = vmatprep.subr.bf16.mxu0 0
        %1108 = vmatpush1.bf16.msra.mxu0 %v1067
        %1109 = vmatprep.subr.bf16.mxu0 0
        %1110 = vmatpush1.bf16.msra.mxu0 %v1066
        %1111 = vmatprep.subr.bf16.mxu0 0
        %1112 = vmatpush1.bf16.msra.mxu0 %v1065
        %1113 = vmatprep.subr.bf16.mxu0 0
        %1114 = vmatpush2.bf16.msra.mxu0 %v1080
        %1115 = vmatprep.subr.bf16.mxu0 0
        %1116 = vmatpush2.bf16.msra.mxu0 %v1079
        %1117 = vmatprep.subr.bf16.mxu0 0
        %1118 = vmatpush2.bf16.msra.mxu0 %v1078
        %1119 = vmatprep.subr.bf16.mxu0 0
        %1120 = vmatpush2.bf16.msra.mxu0 %v1077
        %1121 = vmatprep.subr.bf16.mxu0 0
        %1122 = vmatpush2.bf16.msra.mxu0 %v1076
        %1123 = vmatprep.subr.bf16.mxu0 0
        %1124 = vmatpush2.bf16.msra.mxu0 %v1075
        %1125 = vmatprep.subr.bf16.mxu0 0
        %1126 = vmatpush2.bf16.msra.mxu0 %v1074
        %1127 = vmatprep.subr.bf16.mxu0 0
        %1128 = vmatpush2.bf16.msra.mxu0 %v1073
        %1129 = vmatprep.mubr.bf16.mxu0 %v959
        %1130 = vmatmul.mubr.bf16.gmra.mxu0 %v958
        %v1131 = vpop.f32.mrf.mxu0
        %v1132 = vadd.f32 %v999, %v1131
        %v1133 = vpop.f32.mrf.mxu0
        %v1134 = vpop.f32.mrf.mxu0
        %v1135 = vpop.f32.mrf.mxu0
        %1136 = vdwg.mxu0
        %v1137 = vmax.f32 %v1132, 0.0
        %v1138 = vadd.f32 %v1137, %v769
        %v1139 = vmax.f32 %v1138, 0.0
        %v1141 = vrot.slane %v1139, 6
        %vm1143 = vcmask 1041408
        %v1144 = vsel %vm1143, 0.0, %v1141
        %vm1145 = vcmp.ge.s32.totalorder %v378, 2
        %v1146 = vsel %vm1145, %v1144, 0.0
        %v1147 = vpack.c.bf16 %v1146, %v1146
        %v1148 = vpack.c.bf16 %v1139, %v1139
        %s1149 = scalar_lea.vmem %s4, 256
        %v1150 = vld [vmem:[%s1149] sm:$0xf]
        %v1151 = vld [vmem:[%s1149 + $0x4] sm:$0xf]
        %v1152 = vld [vmem:[%s1149 + $0x8] sm:$0xf]
        %v1153 = vld [vmem:[%s1149 + $0xc] sm:$0xf]
        %v1154 = vld [vmem:[%s1149 + $0x10] sm:$0xf]
        %v1155 = vld [vmem:[%s1149 + $0x14] sm:$0xf]
        %v1156 = vld [vmem:[%s1149 + $0x18] sm:$0xf]
        %v1157 = vld [vmem:[%s1149 + $0x1c] sm:$0xf]
        %v1158 = vld [vmem:[%s1149 + $0x20] sm:$0xf]
        %v1159 = vld [vmem:[%s1149 + $0x24] sm:$0xf]
        %v1160 = vld [vmem:[%s1149 + $0x28] sm:$0xf]
        %v1161 = vld [vmem:[%s1149 + $0x2c] sm:$0xf]
        %v1162 = vld [vmem:[%s1149 + $0x30] sm:$0xf]
        %v1163 = vld [vmem:[%s1149 + $0x34] sm:$0xf]
        %v1164 = vld [vmem:[%s1149 + $0x38] sm:$0xf]
        %v1165 = vld [vmem:[%s1149 + $0x3c] sm:$0xf]
        %v1166 = vld [vmem:[%s1149 + $0x40] sm:$0xf]
        %v1167 = vld [vmem:[%s1149 + $0x44] sm:$0xf]
        %v1168 = vld [vmem:[%s1149 + $0x48] sm:$0xf]
        %v1169 = vld [vmem:[%s1149 + $0x4c] sm:$0xf]
        %v1170 = vld [vmem:[%s1149 + $0x50] sm:$0xf]
        %v1171 = vld [vmem:[%s1149 + $0x54] sm:$0xf]
        %v1172 = vld [vmem:[%s1149 + $0x58] sm:$0xf]
        %v1173 = vld [vmem:[%s1149 + $0x5c] sm:$0xf]
        %v1174 = vld [vmem:[%s1149 + $0x60] sm:$0xf]
        %v1175 = vld [vmem:[%s1149 + $0x64] sm:$0xf]
        %v1176 = vld [vmem:[%s1149 + $0x68] sm:$0xf]
        %v1177 = vld [vmem:[%s1149 + $0x6c] sm:$0xf]
        %v1178 = vld [vmem:[%s1149 + $0x70] sm:$0xf]
        %v1179 = vld [vmem:[%s1149 + $0x74] sm:$0xf]
        %v1180 = vld [vmem:[%s1149 + $0x78] sm:$0xf]
        %v1181 = vld [vmem:[%s1149 + $0x7c] sm:$0xf]
        %s1182 = scalar_lea.vmem %s5, 2
        %v1183 = vld [vmem:[%s1182] sm:$0x1]
        %v1185 = vlaneseq
        %v1186 = vshrl.u32 %v1185, 7
        %v1187 = vsub.s32 0, %v1186
        %v1188 = vrot.slane %v1183, %v1187
        %v1222 = vunpack.c.l.b16 %v1150
        %v1223 = vunpack.c.l.b16 %v1151
        %v1224 = vunpack.c.l.b16 %v1152
        %v1225 = vunpack.c.l.b16 %v1153
        %v1226 = vunpack.c.l.b16 %v1154
        %v1227 = vunpack.c.l.b16 %v1155
        %v1228 = vunpack.c.l.b16 %v1156
        %v1229 = vunpack.c.l.b16 %v1157
        %v1230 = vunpack.c.l.b16 %v1158
        %v1231 = vunpack.c.l.b16 %v1159
        %v1232 = vunpack.c.l.b16 %v1160
        %v1233 = vunpack.c.l.b16 %v1161
        %v1234 = vunpack.c.l.b16 %v1162
        %v1235 = vunpack.c.l.b16 %v1163
        %v1236 = vunpack.c.l.b16 %v1164
        %v1237 = vunpack.c.l.b16 %v1165
        %v1238 = vunpack.c.l.b16 %v1166
        %v1239 = vunpack.c.l.b16 %v1167
        %v1240 = vunpack.c.l.b16 %v1168
        %v1241 = vunpack.c.l.b16 %v1169
        %v1242 = vunpack.c.l.b16 %v1170
        %v1243 = vunpack.c.l.b16 %v1171
        %v1244 = vunpack.c.l.b16 %v1172
        %v1245 = vunpack.c.l.b16 %v1173
        %v1246 = vunpack.c.l.b16 %v1174
        %v1247 = vunpack.c.l.b16 %v1175
        %v1248 = vunpack.c.l.b16 %v1176
        %v1249 = vunpack.c.l.b16 %v1177
        %v1250 = vunpack.c.l.b16 %v1178
        %v1251 = vunpack.c.l.b16 %v1179
        %v1252 = vunpack.c.l.b16 %v1180
        %v1253 = vunpack.c.l.b16 %v1181
        %v1254 = vpack.c.b16 %v1223, %v1222
        %v1255 = vpack.c.b16 %v1225, %v1224
        %v1256 = vpack.c.b16 %v1227, %v1226
        %v1257 = vpack.c.b16 %v1229, %v1228
        %v1258 = vpack.c.b16 %v1231, %v1230
        %v1259 = vpack.c.b16 %v1233, %v1232
        %v1260 = vpack.c.b16 %v1235, %v1234
        %v1261 = vpack.c.b16 %v1237, %v1236
        %v1262 = vpack.c.b16 %v1239, %v1238
        %v1263 = vpack.c.b16 %v1241, %v1240
        %v1264 = vpack.c.b16 %v1243, %v1242
        %v1265 = vpack.c.b16 %v1245, %v1244
        %v1266 = vpack.c.b16 %v1247, %v1246
        %v1267 = vpack.c.b16 %v1249, %v1248
        %v1268 = vpack.c.b16 %v1251, %v1250
        %v1269 = vpack.c.b16 %v1253, %v1252
        %1286 = vmatprep.subr.bf16.mxu0 0
        %1287 = vmatpush1.bf16.msra.mxu0 %v1261
        %1288 = vmatprep.subr.bf16.mxu0 0
        %1289 = vmatpush1.bf16.msra.mxu0 %v1260
        %1290 = vmatprep.subr.bf16.mxu0 0
        %1291 = vmatpush1.bf16.msra.mxu0 %v1259
        %1292 = vmatprep.subr.bf16.mxu0 0
        %1293 = vmatpush1.bf16.msra.mxu0 %v1258
        %1294 = vmatprep.subr.bf16.mxu0 0
        %1295 = vmatpush1.bf16.msra.mxu0 %v1257
        %1296 = vmatprep.subr.bf16.mxu0 0
        %1297 = vmatpush1.bf16.msra.mxu0 %v1256
        %1298 = vmatprep.subr.bf16.mxu0 0
        %1299 = vmatpush1.bf16.msra.mxu0 %v1255
        %1300 = vmatprep.subr.bf16.mxu0 0
        %1301 = vmatpush1.bf16.msra.mxu0 %v1254
        %1302 = vmatprep.subr.bf16.mxu0 0
        %1303 = vmatpush2.bf16.msra.mxu0 %v1269
        %1304 = vmatprep.subr.bf16.mxu0 0
        %1305 = vmatpush2.bf16.msra.mxu0 %v1268
        %1306 = vmatprep.subr.bf16.mxu0 0
        %1307 = vmatpush2.bf16.msra.mxu0 %v1267
        %1308 = vmatprep.subr.bf16.mxu0 0
        %1309 = vmatpush2.bf16.msra.mxu0 %v1266
        %1310 = vmatprep.subr.bf16.mxu0 0
        %1311 = vmatpush2.bf16.msra.mxu0 %v1265
        %1312 = vmatprep.subr.bf16.mxu0 0
        %1313 = vmatpush2.bf16.msra.mxu0 %v1264
        %1314 = vmatprep.subr.bf16.mxu0 0
        %1315 = vmatpush2.bf16.msra.mxu0 %v1263
        %1316 = vmatprep.subr.bf16.mxu0 0
        %1317 = vmatpush2.bf16.msra.mxu0 %v1262
        %1318 = vmatprep.mubr.bf16.mxu0 %v1148
        %1319 = vmatmul.mubr.bf16.gmra.mxu0 %v1147
        %v1320 = vpop.f32.mrf.mxu0
        %v1321 = vadd.f32 %v1188, %v1320
        %v1322 = vpop.f32.mrf.mxu0
        %v1323 = vpop.f32.mrf.mxu0
        %v1324 = vpop.f32.mrf.mxu0
        %1325 = vdwg.mxu0
        %v1326 = vmax.f32 %v1321, 0.0
        %v1328 = vrot.slane %v1326, 6
        %v1330 = vsel %vm1143, 0.0, %v1328
        %v1331 = vsel %vm1145, %v1330, 0.0
        %v1332 = vpack.c.bf16 %v1331, %v1331
        %v1333 = vpack.c.bf16 %v1326, %v1326
        %s1334 = scalar_lea.vmem %s4, 384
        %v1335 = vld [vmem:[%s1334] sm:$0xf]
        %v1336 = vld [vmem:[%s1334 + $0x4] sm:$0xf]
        %v1337 = vld [vmem:[%s1334 + $0x8] sm:$0xf]
        %v1338 = vld [vmem:[%s1334 + $0xc] sm:$0xf]
        %v1339 = vld [vmem:[%s1334 + $0x10] sm:$0xf]
        %v1340 = vld [vmem:[%s1334 + $0x14] sm:$0xf]
        %v1341 = vld [vmem:[%s1334 + $0x18] sm:$0xf]
        %v1342 = vld [vmem:[%s1334 + $0x1c] sm:$0xf]
        %v1343 = vld [vmem:[%s1334 + $0x20] sm:$0xf]
        %v1344 = vld [vmem:[%s1334 + $0x24] sm:$0xf]
        %v1345 = vld [vmem:[%s1334 + $0x28] sm:$0xf]
        %v1346 = vld [vmem:[%s1334 + $0x2c] sm:$0xf]
        %v1347 = vld [vmem:[%s1334 + $0x30] sm:$0xf]
        %v1348 = vld [vmem:[%s1334 + $0x34] sm:$0xf]
        %v1349 = vld [vmem:[%s1334 + $0x38] sm:$0xf]
        %v1350 = vld [vmem:[%s1334 + $0x3c] sm:$0xf]
        %v1351 = vld [vmem:[%s1334 + $0x40] sm:$0xf]
        %v1352 = vld [vmem:[%s1334 + $0x44] sm:$0xf]
        %v1353 = vld [vmem:[%s1334 + $0x48] sm:$0xf]
        %v1354 = vld [vmem:[%s1334 + $0x4c] sm:$0xf]
        %v1355 = vld [vmem:[%s1334 + $0x50] sm:$0xf]
        %v1356 = vld [vmem:[%s1334 + $0x54] sm:$0xf]
        %v1357 = vld [vmem:[%s1334 + $0x58] sm:$0xf]
        %v1358 = vld [vmem:[%s1334 + $0x5c] sm:$0xf]
        %v1359 = vld [vmem:[%s1334 + $0x60] sm:$0xf]
        %v1360 = vld [vmem:[%s1334 + $0x64] sm:$0xf]
        %v1361 = vld [vmem:[%s1334 + $0x68] sm:$0xf]
        %v1362 = vld [vmem:[%s1334 + $0x6c] sm:$0xf]
        %v1363 = vld [vmem:[%s1334 + $0x70] sm:$0xf]
        %v1364 = vld [vmem:[%s1334 + $0x74] sm:$0xf]
        %v1365 = vld [vmem:[%s1334 + $0x78] sm:$0xf]
        %v1366 = vld [vmem:[%s1334 + $0x7c] sm:$0xf]
        %s1367 = scalar_lea.vmem %s5, 3
        %v1368 = vld [vmem:[%s1367] sm:$0x1]
        %v1370 = vlaneseq
        %v1371 = vshrl.u32 %v1370, 7
        %v1372 = vsub.s32 0, %v1371
        %v1373 = vrot.slane %v1368, %v1372
        %v1407 = vunpack.c.l.b16 %v1335
        %v1408 = vunpack.c.l.b16 %v1336
        %v1409 = vunpack.c.l.b16 %v1337
        %v1410 = vunpack.c.l.b16 %v1338
        %v1411 = vunpack.c.l.b16 %v1339
        %v1412 = vunpack.c.l.b16 %v1340
        %v1413 = vunpack.c.l.b16 %v1341
        %v1414 = vunpack.c.l.b16 %v1342
        %v1415 = vunpack.c.l.b16 %v1343
        %v1416 = vunpack.c.l.b16 %v1344
        %v1417 = vunpack.c.l.b16 %v1345
        %v1418 = vunpack.c.l.b16 %v1346
        %v1419 = vunpack.c.l.b16 %v1347
        %v1420 = vunpack.c.l.b16 %v1348
        %v1421 = vunpack.c.l.b16 %v1349
        %v1422 = vunpack.c.l.b16 %v1350
        %v1423 = vunpack.c.l.b16 %v1351
        %v1424 = vunpack.c.l.b16 %v1352
        %v1425 = vunpack.c.l.b16 %v1353
        %v1426 = vunpack.c.l.b16 %v1354
        %v1427 = vunpack.c.l.b16 %v1355
        %v1428 = vunpack.c.l.b16 %v1356
        %v1429 = vunpack.c.l.b16 %v1357
        %v1430 = vunpack.c.l.b16 %v1358
        %v1431 = vunpack.c.l.b16 %v1359
        %v1432 = vunpack.c.l.b16 %v1360
        %v1433 = vunpack.c.l.b16 %v1361
        %v1434 = vunpack.c.l.b16 %v1362
        %v1435 = vunpack.c.l.b16 %v1363
        %v1436 = vunpack.c.l.b16 %v1364
        %v1437 = vunpack.c.l.b16 %v1365
        %v1438 = vunpack.c.l.b16 %v1366
        %v1439 = vpack.c.b16 %v1408, %v1407
        %v1440 = vpack.c.b16 %v1410, %v1409
        %v1441 = vpack.c.b16 %v1412, %v1411
        %v1442 = vpack.c.b16 %v1414, %v1413
        %v1443 = vpack.c.b16 %v1416, %v1415
        %v1444 = vpack.c.b16 %v1418, %v1417
        %v1445 = vpack.c.b16 %v1420, %v1419
        %v1446 = vpack.c.b16 %v1422, %v1421
        %v1447 = vpack.c.b16 %v1424, %v1423
        %v1448 = vpack.c.b16 %v1426, %v1425
        %v1449 = vpack.c.b16 %v1428, %v1427
        %v1450 = vpack.c.b16 %v1430, %v1429
        %v1451 = vpack.c.b16 %v1432, %v1431
        %v1452 = vpack.c.b16 %v1434, %v1433
        %v1453 = vpack.c.b16 %v1436, %v1435
        %v1454 = vpack.c.b16 %v1438, %v1437
        %1471 = vmatprep.subr.bf16.mxu0 0
        %1472 = vmatpush1.bf16.msra.mxu0 %v1446
        %1473 = vmatprep.subr.bf16.mxu0 0
        %1474 = vmatpush1.bf16.msra.mxu0 %v1445
        %1475 = vmatprep.subr.bf16.mxu0 0
        %1476 = vmatpush1.bf16.msra.mxu0 %v1444
        %1477 = vmatprep.subr.bf16.mxu0 0
        %1478 = vmatpush1.bf16.msra.mxu0 %v1443
        %1479 = vmatprep.subr.bf16.mxu0 0
        %1480 = vmatpush1.bf16.msra.mxu0 %v1442
        %1481 = vmatprep.subr.bf16.mxu0 0
        %1482 = vmatpush1.bf16.msra.mxu0 %v1441
        %1483 = vmatprep.subr.bf16.mxu0 0
        %1484 = vmatpush1.bf16.msra.mxu0 %v1440
        %1485 = vmatprep.subr.bf16.mxu0 0
        %1486 = vmatpush1.bf16.msra.mxu0 %v1439
        %1487 = vmatprep.subr.bf16.mxu0 0
        %1488 = vmatpush2.bf16.msra.mxu0 %v1454
        %1489 = vmatprep.subr.bf16.mxu0 0
        %1490 = vmatpush2.bf16.msra.mxu0 %v1453
        %1491 = vmatprep.subr.bf16.mxu0 0
        %1492 = vmatpush2.bf16.msra.mxu0 %v1452
        %1493 = vmatprep.subr.bf16.mxu0 0
        %1494 = vmatpush2.bf16.msra.mxu0 %v1451
        %1495 = vmatprep.subr.bf16.mxu0 0
        %1496 = vmatpush2.bf16.msra.mxu0 %v1450
        %1497 = vmatprep.subr.bf16.mxu0 0
        %1498 = vmatpush2.bf16.msra.mxu0 %v1449
        %1499 = vmatprep.subr.bf16.mxu0 0
        %1500 = vmatpush2.bf16.msra.mxu0 %v1448
        %1501 = vmatprep.subr.bf16.mxu0 0
        %1502 = vmatpush2.bf16.msra.mxu0 %v1447
        %1503 = vmatprep.mubr.bf16.mxu0 %v1333
        %1504 = vmatmul.mubr.bf16.gmra.mxu0 %v1332
        %v1505 = vpop.f32.mrf.mxu0
        %v1506 = vadd.f32 %v1373, %v1505
        %v1507 = vpop.f32.mrf.mxu0
        %v1508 = vpop.f32.mrf.mxu0
        %v1509 = vpop.f32.mrf.mxu0
        %1510 = vdwg.mxu0
        %v1511 = vmax.f32 %v1506, 0.0
        %v1512 = vadd.f32 %v1511, %v1139
        %v1513 = vmax.f32 %v1512, 0.0
        %v1514 = vrot.slane %v767, 4
        %v1515 = vadd.f32 %v767, %v1514
        %v1516 = vrot.slane %v1515, 2
        %v1517 = vadd.f32 %v1515, %v1516
        %v1518 = vrot.slane %v1517, 1
        %v1519 = vadd.f32 %v1517, %v1518
        %v1520 = vrcp.pop 8.0
        %v1521 = vmul.f32 %v1519, %v1520
        %v1522 = vrot.slane %v768, 4
        %v1523 = vadd.f32 %v768, %v1522
        %v1524 = vrot.slane %v1523, 2
        %v1525 = vadd.f32 %v1523, %v1524
        %v1526 = vrot.slane %v1525, 1
        %v1527 = vadd.f32 %v1525, %v1526
        %v1528 = vmul.f32 %v1527, %v1520
        %v1529 = vrot.slane %v1513, 4
        %v1530 = vadd.f32 %v1513, %v1529
        %v1531 = vrot.slane %v1530, 2
        %v1532 = vadd.f32 %v1530, %v1531
        %v1533 = vrot.slane %v1532, 1
        %v1534 = vadd.f32 %v1532, %v1533
        %v1535 = vmul.f32 %v1534, %v1520
        %v1536 = vld [vmem:[#allocation5] sm:$0xff]
        %v1537 = vld [vmem:[#allocation5 + $0x8] sm:$0xff]
        %v1538 = vld [vmem:[#allocation5 + $0x10] sm:$0xff]
        %v1539 = vld [vmem:[#allocation5 + $0x18] sm:$0xff]
        %v1540 = vld [vmem:[#allocation5 + $0x20] sm:$0xff]
        %v1541 = vld [vmem:[#allocation5 + $0x28] sm:$0xff]
        %v1542 = vld [vmem:[#allocation5 + $0x30] sm:$0xff]
        %v1543 = vld [vmem:[#allocation5 + $0x38] sm:$0xff]
        %v1544 = vld [vmem:[#allocation5 + $0x40] sm:$0xff]
        %v1545 = vld [vmem:[#allocation5 + $0x48] sm:$0xff]
        %v1546 = vld [vmem:[#allocation5 + $0x50] sm:$0xff]
        %v1547 = vld [vmem:[#allocation5 + $0x58] sm:$0xff]
        %v1548 = vld [vmem:[#allocation5 + $0x60] sm:$0xff]
        %v1549 = vld [vmem:[#allocation5 + $0x68] sm:$0xff]
        %v1550 = vld [vmem:[#allocation5 + $0x70] sm:$0xff]
        %v1551 = vld [vmem:[#allocation5 + $0x78] sm:$0xff]
        %v1552 = vld [vmem:[#allocation5 + $0x80] sm:$0xff]
        %v1553 = vld [vmem:[#allocation5 + $0x88] sm:$0xff]
        %v1554 = vld [vmem:[#allocation5 + $0x90] sm:$0xff]
        %v1555 = vld [vmem:[#allocation5 + $0x98] sm:$0xff]
        %v1556 = vld [vmem:[#allocation5 + $0xa0] sm:$0xff]
        %v1557 = vld [vmem:[#allocation5 + $0xa8] sm:$0xff]
        %v1558 = vld [vmem:[#allocation5 + $0xb0] sm:$0xff]
        %v1559 = vld [vmem:[#allocation5 + $0xb8] sm:$0xff]
        %v1560 = vld [vmem:[#allocation5 + $0xc0] sm:$0xff]
        %v1561 = vld [vmem:[#allocation5 + $0xc8] sm:$0xff]
        %v1562 = vld [vmem:[#allocation5 + $0xd0] sm:$0xff]
        %v1563 = vld [vmem:[#allocation5 + $0xd8] sm:$0xff]
        %v1564 = vld [vmem:[#allocation5 + $0xe0] sm:$0xff]
        %v1565 = vld [vmem:[#allocation5 + $0xe8] sm:$0xff]
        %v1566 = vld [vmem:[#allocation5 + $0xf0] sm:$0xff]
        %v1567 = vld [vmem:[#allocation5 + $0xf8] sm:$0xff]
        %v1568 = vld [vmem:[#allocation5 + $0x100] sm:$0xff]
        %v1569 = vld [vmem:[#allocation5 + $0x108] sm:$0xff]
        %v1570 = vld [vmem:[#allocation5 + $0x110] sm:$0xff]
        %v1571 = vld [vmem:[#allocation5 + $0x118] sm:$0xff]
        %v1572 = vld [vmem:[#allocation5 + $0x120] sm:$0xff]
        %v1573 = vld [vmem:[#allocation5 + $0x128] sm:$0xff]
        %v1574 = vld [vmem:[#allocation5 + $0x130] sm:$0xff]
        %v1575 = vld [vmem:[#allocation5 + $0x138] sm:$0xff]
        %v1576 = vld [vmem:[#allocation5 + $0x140] sm:$0xff]
        %v1577 = vld [vmem:[#allocation5 + $0x148] sm:$0xff]
        %v1578 = vld [vmem:[#allocation5 + $0x150] sm:$0xff]
        %v1579 = vld [vmem:[#allocation5 + $0x158] sm:$0xff]
        %v1580 = vld [vmem:[#allocation5 + $0x160] sm:$0xff]
        %v1581 = vld [vmem:[#allocation5 + $0x168] sm:$0xff]
        %v1582 = vld [vmem:[#allocation5 + $0x170] sm:$0xff]
        %v1583 = vld [vmem:[#allocation5 + $0x178] sm:$0xff]
        %v1584 = vld [vmem:[%s7] sm:$0x1]
        %1585 = vmatprep.subr.mxu0 0.0
        %1586 = vmatpush1.msra.mxu0 %v1551
        %1587 = vmatprep.subr.mxu0 0.0
        %1588 = vmatpush1.msra.mxu0 %v1550
        %1589 = vmatprep.subr.mxu0 0.0
        %1590 = vmatpush1.msra.mxu0 %v1549
        %1591 = vmatprep.subr.mxu0 0.0
        %1592 = vmatpush1.msra.mxu0 %v1548
        %1593 = vmatprep.subr.mxu0 0.0
        %1594 = vmatpush1.msra.mxu0 %v1547
        %1595 = vmatprep.subr.mxu0 0.0
        %1596 = vmatpush1.msra.mxu0 %v1546
        %1597 = vmatprep.subr.mxu0 0.0
        %1598 = vmatpush1.msra.mxu0 %v1545
        %1599 = vmatprep.subr.mxu0 0.0
        %1600 = vmatpush1.msra.mxu0 %v1544
        %1601 = vmatprep.subr.mxu0 0.0
        %1602 = vmatpush1.msra.mxu0 %v1543
        %1603 = vmatprep.subr.mxu0 0.0
        %1604 = vmatpush1.msra.mxu0 %v1542
        %1605 = vmatprep.subr.mxu0 0.0
        %1606 = vmatpush1.msra.mxu0 %v1541
        %1607 = vmatprep.subr.mxu0 0.0
        %1608 = vmatpush1.msra.mxu0 %v1540
        %1609 = vmatprep.subr.mxu0 0.0
        %1610 = vmatpush1.msra.mxu0 %v1539
        %1611 = vmatprep.subr.mxu0 0.0
        %1612 = vmatpush1.msra.mxu0 %v1538
        %1613 = vmatprep.subr.mxu0 0.0
        %1614 = vmatpush1.msra.mxu0 %v1537
        %1615 = vmatprep.subr.mxu0 0.0
        %1616 = vmatpush1.msra.mxu0 %v1536
        %1617 = vmatprep.subr.mxu0 0.0
        %1618 = vmatpush2.msra.mxu0 %v1567
        %1619 = vmatprep.subr.mxu0 0.0
        %1620 = vmatpush2.msra.mxu0 %v1566
        %1621 = vmatprep.subr.mxu0 0.0
        %1622 = vmatpush2.msra.mxu0 %v1565
        %1623 = vmatprep.subr.mxu0 0.0
        %1624 = vmatpush2.msra.mxu0 %v1564
        %1625 = vmatprep.subr.mxu0 0.0
        %1626 = vmatpush2.msra.mxu0 %v1563
        %1627 = vmatprep.subr.mxu0 0.0
        %1628 = vmatpush2.msra.mxu0 %v1562
        %1629 = vmatprep.subr.mxu0 0.0
        %1630 = vmatpush2.msra.mxu0 %v1561
        %1631 = vmatprep.subr.mxu0 0.0
        %1632 = vmatpush2.msra.mxu0 %v1560
        %1633 = vmatprep.subr.mxu0 0.0
        %1634 = vmatpush2.msra.mxu0 %v1559
        %1635 = vmatprep.subr.mxu0 0.0
        %1636 = vmatpush2.msra.mxu0 %v1558
        %1637 = vmatprep.subr.mxu0 0.0
        %1638 = vmatpush2.msra.mxu0 %v1557
        %1639 = vmatprep.subr.mxu0 0.0
        %1640 = vmatpush2.msra.mxu0 %v1556
        %1641 = vmatprep.subr.mxu0 0.0
        %1642 = vmatpush2.msra.mxu0 %v1555
        %1643 = vmatprep.subr.mxu0 0.0
        %1644 = vmatpush2.msra.mxu0 %v1554
        %1645 = vmatprep.subr.mxu0 0.0
        %1646 = vmatpush2.msra.mxu0 %v1553
        %1647 = vmatprep.subr.mxu0 0.0
        %1648 = vmatpush2.msra.mxu0 %v1552
        %1649 = vmatprep.mubr.f32.mxu0 %v1535
        %1650 = vmatmul.mubr.f32.gmra.mxu0 %v1521
        %v1651 = vpop.f32.mrf.mxu0
        %v1652 = vadd.f32 %v1584, %v1651
        %v1653 = vpop.f32.mrf.mxu0
        %1654 = vdwg.mxu0
        %1655 = vmatprep.subr.mxu0 0.0
        %1656 = vmatpush1.msra.mxu0 %v1583
        %1657 = vmatprep.subr.mxu0 0.0
        %1658 = vmatpush1.msra.mxu0 %v1582
        %1659 = vmatprep.subr.mxu0 0.0
        %1660 = vmatpush1.msra.mxu0 %v1581
        %1661 = vmatprep.subr.mxu0 0.0
        %1662 = vmatpush1.msra.mxu0 %v1580
        %1663 = vmatprep.subr.mxu0 0.0
        %1664 = vmatpush1.msra.mxu0 %v1579
        %1665 = vmatprep.subr.mxu0 0.0
        %1666 = vmatpush1.msra.mxu0 %v1578
        %1667 = vmatprep.subr.mxu0 0.0
        %1668 = vmatpush1.msra.mxu0 %v1577
        %1669 = vmatprep.subr.mxu0 0.0
        %1670 = vmatpush1.msra.mxu0 %v1576
        %1671 = vmatprep.subr.mxu0 0.0
        %1672 = vmatpush1.msra.mxu0 %v1575
        %1673 = vmatprep.subr.mxu0 0.0
        %1674 = vmatpush1.msra.mxu0 %v1574
        %1675 = vmatprep.subr.mxu0 0.0
        %1676 = vmatpush1.msra.mxu0 %v1573
        %1677 = vmatprep.subr.mxu0 0.0
        %1678 = vmatpush1.msra.mxu0 %v1572
        %1679 = vmatprep.subr.mxu0 0.0
        %1680 = vmatpush1.msra.mxu0 %v1571
        %1681 = vmatprep.subr.mxu0 0.0
        %1682 = vmatpush1.msra.mxu0 %v1570
        %1683 = vmatprep.subr.mxu0 0.0
        %1684 = vmatpush1.msra.mxu0 %v1569
        %1685 = vmatprep.subr.mxu0 0.0
        %1686 = vmatpush1.msra.mxu0 %v1568
        %1687 = vmatprep.subr.mxu0 0.0
        %1688 = vmatpush2.msra.mxu0 0.0
        %1689 = vmatprep.subr.mxu0 0.0
        %1690 = vmatpush2.msra.mxu0 0.0
        %1691 = vmatprep.subr.mxu0 0.0
        %1692 = vmatpush2.msra.mxu0 0.0
        %1693 = vmatprep.subr.mxu0 0.0
        %1694 = vmatpush2.msra.mxu0 0.0
        %1695 = vmatprep.subr.mxu0 0.0
        %1696 = vmatpush2.msra.mxu0 0.0
        %1697 = vmatprep.subr.mxu0 0.0
        %1698 = vmatpush2.msra.mxu0 0.0
        %1699 = vmatprep.subr.mxu0 0.0
        %1700 = vmatpush2.msra.mxu0 0.0
        %1701 = vmatprep.subr.mxu0 0.0
        %1702 = vmatpush2.msra.mxu0 0.0
        %1703 = vmatprep.subr.mxu0 0.0
        %1704 = vmatpush2.msra.mxu0 0.0
        %1705 = vmatprep.subr.mxu0 0.0
        %1706 = vmatpush2.msra.mxu0 0.0
        %1707 = vmatprep.subr.mxu0 0.0
        %1708 = vmatpush2.msra.mxu0 0.0
        %1709 = vmatprep.subr.mxu0 0.0
        %1710 = vmatpush2.msra.mxu0 0.0
        %1711 = vmatprep.subr.mxu0 0.0
        %1712 = vmatpush2.msra.mxu0 0.0
        %1713 = vmatprep.subr.mxu0 0.0
        %1714 = vmatpush2.msra.mxu0 0.0
        %1715 = vmatprep.subr.mxu0 0.0
        %1716 = vmatpush2.msra.mxu0 0.0
        %1717 = vmatprep.subr.mxu0 0.0
        %1718 = vmatpush2.msra.mxu0 0.0
        %1719 = vmatprep.mubr.f32.mxu0 0.0
        %1720 = vmatmul.mubr.f32.gmra.mxu0 %v1528
        %v1721 = vpop.f32.mrf.mxu0
        %v1722 = vadd.f32 %v1652, %v1721
        %v1723 = vpop.f32.mrf.mxu0
        %1724 = vdwg.mxu0
        %1725 = vst [vmem:[%s340] sm:$0x1] %v1722
        %s1726 = sand.u32 %s210, 1
        %s1727 = scalar_lea.sflag [#allocation4], %s1726
        %s1728 = sand.u32 %s210, 1
        %s1729 = scalar_lea.vmem [#allocation7], %s1728
        // Predicated region
        $region61: #{_lambda_.1} parent=51 // pred_check
          %p1730 = pneg %p220
        $region62: #{_lambda_.1} parent=51 // pred_check_branch
          %1732 = sbr.rel (%p1730) target = $region64
        $region63: #{_lambda_.1} parent=51 // pred_region
          %s1734 = ssub.s32 16, 16
          %1735 = vsyncadd %s1727, %s1734
          %s1736 = smul.addr %s24, 16
          %s1737 = scalar_lea.hbm %s8, %s1736
          %s1739 = sshll.u32 %s1729, 4
          %s1740 = int_to_ptr.vmem [resolvable:$true] %s1739
          %1742 = dma.vmem_to_hbm [thread:$0]  %s1740, 16, %s1737, %s1727
        $region64: #{_lambda_.1} parent=51 // pred_fallthru
          _
      $region52: #{_lambda_.1} parent=5 // pred_fallthru
        _
      %p1743 = scmp.le.s32.totalorder 2, %s19
      // Predicated region
      $region65: #{_lambda_.1} parent=5 // pred_check
        %p1744 = pneg %p1743
      $region66: #{_lambda_.1} parent=5 // pred_check_branch
        %1746 = sbr.rel (%p1744) target = $region68
      $region67: #{_lambda_.1} parent=5 // pred_region
        %s1747 = ssub.s32 %s19, 2
        // Predicated region
        $region69: #{_lambda_.1} parent=67 // pred_check
          %p1748 = pneg %p226
        $region70: #{_lambda_.1} parent=67 // pred_check_branch
          %1750 = sbr.rel (%p1748) target = $region72
        $region71: #{_lambda_.1} parent=67 // pred_region
          %s1751 = sand.u32 %s211, 1
          %s1752 = scalar_lea.sflag [#allocation4], %s1751
          %s1753 = sand.u32 %s211, 1
          %s1754 = scalar_lea.vmem [#allocation7], %s1753
          %1755 = dma.done %s1752, 16
        $region72: #{_lambda_.1} parent=67 // pred_fallthru
          _
      $region68: #{_lambda_.1} parent=5 // pred_fallthru
        _
    $region6: #{_lambda_.1} parent=1 // loop_footer
      %s23 = sadd.s32 1, %s19
    $region7: #{_lambda_.1} parent=1 // loop_footer_branch
      %18 = sbr.rel target = $region3
    $region8: #{_lambda_.1} parent=1 // loop_exit
      _
    %1756 = vsyncpa [#allocation3], 1
    %s1757 = scalar_lea.sflag [#allocation3], 1
    %1758 = vsyncpa %s1757, 1
    %1759 = vsyncpa [#allocation6], 1
    %1760 = vsyncpa [#allocation4], 1
    %s1761 = scalar_lea.sflag [#allocation4], 1
    %1762 = vsyncpa %s1761, 1

</llo_original>
